<compile_context>
chip_gen: v7x
topology: tpu7x:2x2x1
jax: 0.10.0
libtpu: 0.0.40
codegen_flags: <defaults>
</compile_context>

<pallas_src>
import functools

import jax
import jax.numpy as jnp
from jax.experimental import pallas as pl
from jax.experimental.pallas import tpu as pltpu

LANES = 128
BN_EPS_Z = 1e-5    # nn.BatchNorm1d default eps (bnz)
BN_EPS = 1e-10     # eps used by every other BatchNorm layer in the module

# Static row indices into the packed weight slab (order must match pack_params).
(W_Z, W_1, W_2, W_3, W_4, W_5NX, W_5NZ, W_5,
 W_MU, W_SIG, W_6, W_7, W_8, W_9, W_10, W_11) = range(16)
# Static row indices into the packed vector slab.
(V_GZ, V_BZ, V_BSIG, V_B11) = range(4)


def augmenter_kernel(in_ref, w_ref, v_ref, out_ref, *, use_noise):
    inv_b = 1.0 / in_ref.shape[1]        # 1 / batch

    def mm(h, idx):
        # Single aligned (B,128)@(128,128) MXU pass; weights may be bf16.
        w = w_ref[idx]
        return jnp.dot(h.astype(w.dtype), w, preferred_element_type=jnp.float32)

    def bn(h, eps=BN_EPS):
        # BatchNorm1d forward, training mode, affine=False (biased variance).
        # Shifted two-moment form: both sublane reductions are independent
        # (issued off `d`), and the row-0 shift avoids E[h^2]-m^2 cancellation.
        d = h - h[0:1, :]
        s1 = jnp.sum(d, axis=0, keepdims=True)
        s2 = jnp.sum(d * d, axis=0, keepdims=True)
        m = s1 * inv_b
        var = jnp.maximum(s2 * inv_b - m * m, 0.0)
        return (d - m) * jax.lax.rsqrt(var + eps)

    def bn_relu(h):
        return jnp.maximum(bn(h), 0.0)

    x, mask, z, eps = in_ref[0], in_ref[1], in_ref[2], in_ref[3]

    # z = elu(bnz(noise(z)))        (bnz is affine; gamma/beta live in v_slab)
    zn = bn(mm(z, W_Z), eps=BN_EPS_Z) * v_ref[V_GZ:V_GZ + 1, :] + v_ref[V_BZ:V_BZ + 1, :]
    # ELU(alpha=1). exp(x)-1 kept (instead of expm1) to stay within guaranteed
    # Mosaic lowerings; difference is ulp-level for BN-normalized inputs.
    zact = jnp.where(zn > 0, zn, jnp.exp(zn) - 1.0)

    # Encoder: relu(bn(fc_k(.))).  Pre-BN Linear biases cancel exactly -> omitted.
    h = x * mask                     # dropout (mask pre-scaled by 1/(1-p))
    h = bn_relu(mm(h, W_1))
    h = bn_relu(mm(h, W_2))
    h = bn_relu(mm(h, W_3))
    h = bn_relu(mm(h, W_4))
    if use_noise:
        # cat((x, z), dim=1) @ W5n  ==  x @ W5n[:n_dim] + z @ W5n[n_dim:]
        h = bn_relu(mm(h, W_5NX) + mm(zact, W_5NZ))
    else:
        h = bn_relu(mm(h, W_5))

    mu = bn(mm(h, W_MU))
    sig_lin = mm(h, W_SIG) + v_ref[V_BSIG:V_BSIG + 1, :]
    sigma = pl.reciprocal(1.0 + jnp.exp(-sig_lin), approx=True)   # sigmoid on the EUP
    s = mu + sigma * eps             # reparam_trick: mu + sigma * N(0,1)

    # Decoder
    h = bn_relu(mm(s, W_6))
    h = bn_relu(mm(h, W_7))
    h = bn_relu(mm(h, W_8))
    h = bn_relu(mm(h, W_9))
    h = bn_relu(mm(h, W_10))
    # fc11's packed weight/bias are pre-shifted to lanes [latent, latent+input),
    # so x_rec lands right after s: both outputs pack into one 128-lane row.
    x_rec = jnp.maximum(mm(h, W_11) + v_ref[V_B11:V_B11 + 1, :], 0.0)   # n_zim == 1 branch

    out_ref[...] = s + x_rec         # disjoint lane supports -> exact pack, one unmasked store


def pack_params(params, *, noise_dim, latent_dim, input_dim, n_dim,
                weight_dtype=jnp.float32):
    """Pack all parameters the kernel needs into two dense slabs (done once)."""
    h1, h5 = input_dim // 5, n_dim // 5
    assert max(noise_dim, latent_dim, input_dim, n_dim, h1, h5) <= LANES, \
        "kernel assumes every feature dim fits in 128 lanes"
    assert latent_dim + input_dim <= LANES, \
        "packed (s | x_rec) output must fit in 128 lanes"

    def pad_w(w, col_off=0):
        k, n = w.shape
        return jnp.zeros((LANES, LANES), jnp.float32).at[:k, col_off:col_off + n].set(w)

    def pad_v(v, col_off=0):
        v = jnp.reshape(v, (-1,))
        return jnp.zeros((LANES,), jnp.float32).at[col_off:col_off + v.shape[0]].set(v)

    w_slab = jnp.stack([
        pad_w(params["wz"]),
        pad_w(params["w1"]), pad_w(params["w2"]),
        pad_w(params["w3"]), pad_w(params["w4"]),
        pad_w(params["w5nx"]), pad_w(params["w5nz"]), pad_w(params["w5"]),
        pad_w(params["wmu"]), pad_w(params["wsig"]),
        pad_w(params["w6"]), pad_w(params["w7"]), pad_w(params["w8"]),
        pad_w(params["w9"]), pad_w(params["w10"]),
        pad_w(params["w11"], col_off=latent_dim),   # lane-shifted: x_rec packs after s
    ]).astype(weight_dtype)

    # Only vectors that survive: bnz affine params + the two biases not followed
    # by an affine=False BN (fc_sigma, fc11).  All other Linear biases cancel.
    v_slab = jnp.stack([
        pad_v(params["gz"]),
        pad_v(params["bz"]),
        pad_v(params["bsig"]),
        pad_v(params["b11"], col_off=latent_dim),
    ])
    return w_slab, v_slab


def augmenter_forward(x, z, dropout_mask, eps_noise, w_slab, v_slab, *,
                      latent_dim, input_dim, use_noise=True):
    B = x.shape[0]

    def pad_in(a):
        return jnp.pad(a.astype(jnp.float32), ((0, 0), (0, LANES - a.shape[1])))

    # One lane-dense input slab -> a single input DMA for all activations.
    in_slab = jnp.stack([pad_in(x), pad_in(dropout_mask), pad_in(z), pad_in(eps_noise)])

    vmem = pl.BlockSpec(memory_space=pltpu.MemorySpace.VMEM)
    packed = pl.pallas_call(
        functools.partial(augmenter_kernel, use_noise=use_noise),
        out_shape=jax.ShapeDtypeStruct((B, LANES), jnp.float32),
        in_specs=[vmem, vmem, vmem],
        out_specs=vmem,
    )(in_slab, w_slab, v_slab)

    s = packed[:, :latent_dim]
    x_rec = packed[:, latent_dim:latent_dim + input_dim]
    return s, x_rec


def _linear_init(key, fan_in, fan_out):
    # PyTorch nn.Linear default: U(-1/sqrt(fan_in), 1/sqrt(fan_in)); weight kept as (in, out).
    kw, kb = jax.random.split(key)
    bound = 1.0 / float(fan_in) ** 0.5
    w = jax.random.uniform(kw, (fan_in, fan_out), jnp.float32, -bound, bound)
    b = jax.random.uniform(kb, (1, fan_out), jnp.float32, -bound, bound)
    return w, b


def make_params(key, noise_dim, latent_dim, input_dim, n_dim):
    h1 = input_dim // 5
    h5 = n_dim // 5
    keys = jax.random.split(key, 16)
    p = {}
    # noise linear (bias=False) + bnz affine params (gamma=1, beta=0 at init)
    bound = 1.0 / float(noise_dim) ** 0.5
    p["wz"] = jax.random.uniform(keys[0], (noise_dim, noise_dim), jnp.float32, -bound, bound)
    p["gz"] = jnp.ones((1, noise_dim), jnp.float32)
    p["bz"] = jnp.zeros((1, noise_dim), jnp.float32)
    # Biases b1..b10 / b5n / b5 / bmu are created for module fidelity but are NOT
    # packed: each is followed by an affine=False BatchNorm which cancels them exactly.
    p["w1"], p["b1"] = _linear_init(keys[1], input_dim, h1)
    p["w2"], p["b2"] = _linear_init(keys[2], h1, h1)
    p["w3"], p["b3"] = _linear_init(keys[3], h1, n_dim)
    p["w4"], p["b4"] = _linear_init(keys[4], n_dim, n_dim)
    w5n, b5n = _linear_init(keys[5], n_dim + noise_dim, h5)
    p["w5nx"], p["w5nz"], p["b5n"] = w5n[:n_dim], w5n[n_dim:], b5n
    p["w5"], p["b5"] = _linear_init(keys[6], n_dim, h5)
    p["wmu"], p["bmu"] = _linear_init(keys[7], h5, latent_dim)
    p["wsig"], p["bsig"] = _linear_init(keys[8], h5, latent_dim)
    p["w6"], p["b6"] = _linear_init(keys[9], latent_dim, h5)
    p["w7"], p["b7"] = _linear_init(keys[10], h5, n_dim)
    p["w8"], p["b8"] = _linear_init(keys[11], n_dim, n_dim)
    p["w9"], p["b9"] = _linear_init(keys[12], n_dim, h1)
    p["w10"], p["b10"] = _linear_init(keys[13], h1, h1)
    p["w11"], p["b11"] = _linear_init(keys[14], h1, input_dim)
    return p


if __name__ == "__main__":
    # Small, module-consistent shapes (B multiple of 8 sublanes).
    B, noise_dim, latent_dim, input_dim, n_dim, p_drop = 8, 16, 8, 50, 20, 0.2

    root = jax.random.PRNGKey(0)
    k_params, k_x, k_z, k_mask, k_eps = jax.random.split(root, 5)

    params = make_params(k_params, noise_dim, latent_dim, input_dim, n_dim)
    # weight_dtype=jnp.bfloat16 halves weight DMA bytes and hits the bf16 MXU
    # fast path on v6e/v7x; float32 keeps bit-faithful f32 semantics (used here).
    w_slab, v_slab = pack_params(params, noise_dim=noise_dim, latent_dim=latent_dim,
                                 input_dim=input_dim, n_dim=n_dim,
                                 weight_dtype=jnp.float32)

    x = jax.random.normal(k_x, (B, input_dim), jnp.float32)
    z = jax.random.normal(k_z, (B, noise_dim), jnp.float32)
    keep = 1.0 - p_drop
    dropout_mask = (jax.random.bernoulli(k_mask, keep, (B, input_dim))
                    .astype(jnp.float32) / keep)
    eps_noise = jax.random.normal(k_eps, (B, latent_dim), jnp.float32)

    s, x_rec = augmenter_forward(x, z, dropout_mask, eps_noise, w_slab, v_slab,
                                 latent_dim=latent_dim, input_dim=input_dim,
                                 use_noise=True)
    jax.block_until_ready((s, x_rec))
    assert s.shape == (B, latent_dim) and x_rec.shape == (B, input_dim)
    assert bool(jnp.all(jnp.isfinite(s))) and bool(jnp.all(jnp.isfinite(x_rec)))
    print("KERNEL_OK")
</pallas_src>

<mosaic_0001>
module attributes {stable_mosaic.version = 11 : i64} {
  func.func @augmenter_kernel(%arg0: memref<4x8x128xf32, #tpu.memory_space<vmem>>, %arg1: memref<16x128x128xf32, #tpu.memory_space<vmem>>, %arg2: memref<4x128xf32, #tpu.memory_space<vmem>>, %arg3: memref<8x128xf32, #tpu.memory_space<vmem>>) attributes {dimension_semantics = [], scalar_prefetch = 0 : i64, scratch_operands = 0 : i64, tpu.core_type = #tpu.core_type<tc>} {
    %c0 = arith.constant 0 : index
    %c0_0 = arith.constant 0 : index
    %c0_1 = arith.constant 0 : index
    %0 = vector.load %arg0[%c0, %c0_0, %c0_1] : memref<4x8x128xf32, #tpu.memory_space<vmem>>, vector<1x8x128xf32>
    %1 = vector.shape_cast %0 : vector<1x8x128xf32> to vector<8x128xf32>
    %c1 = arith.constant 1 : index
    %c0_2 = arith.constant 0 : index
    %c0_3 = arith.constant 0 : index
    %2 = vector.load %arg0[%c1, %c0_2, %c0_3] : memref<4x8x128xf32, #tpu.memory_space<vmem>>, vector<1x8x128xf32>
    %3 = vector.shape_cast %2 : vector<1x8x128xf32> to vector<8x128xf32>
    %c2 = arith.constant 2 : index
    %c0_4 = arith.constant 0 : index
    %c0_5 = arith.constant 0 : index
    %4 = vector.load %arg0[%c2, %c0_4, %c0_5] : memref<4x8x128xf32, #tpu.memory_space<vmem>>, vector<1x8x128xf32>
    %5 = vector.shape_cast %4 : vector<1x8x128xf32> to vector<8x128xf32>
    %c3 = arith.constant 3 : index
    %c0_6 = arith.constant 0 : index
    %c0_7 = arith.constant 0 : index
    %6 = vector.load %arg0[%c3, %c0_6, %c0_7] : memref<4x8x128xf32, #tpu.memory_space<vmem>>, vector<1x8x128xf32>
    %7 = vector.shape_cast %6 : vector<1x8x128xf32> to vector<8x128xf32>
    %c0_8 = arith.constant 0 : index
    %c0_9 = arith.constant 0 : index
    %c0_10 = arith.constant 0 : index
    %8 = vector.load %arg1[%c0_8, %c0_9, %c0_10] : memref<16x128x128xf32, #tpu.memory_space<vmem>>, vector<1x128x128xf32>
    %9 = vector.shape_cast %8 : vector<1x128x128xf32> to vector<128x128xf32>
    %cst = arith.constant dense<0.000000e+00> : vector<8x128xf32>
    %10 = tpu.matmul %5, %9, %cst {dimension_numbers = #tpu.dot_dimension_numbers<[1], [0], [0], [1], [0, 0, 1, 1], [], []>} : vector<8x128xf32>, vector<128x128xf32>, vector<8x128xf32> -> vector<8x128xf32>
    %11 = vector.extract_strided_slice %10 {offsets = [0, 0], sizes = [1, 128], strides = [1, 1]} : vector<8x128xf32> to vector<1x128xf32>
    %12 = vector.broadcast %11 : vector<1x128xf32> to vector<8x128xf32>
    %13 = arith.subf %10, %12 : vector<8x128xf32>
    %cst_11 = arith.constant dense<0.000000e+00> : vector<128xf32>
    %14 = vector.multi_reduction <add>, %13, %cst_11 [0] : vector<8x128xf32> to vector<128xf32>
    %15 = vector.shape_cast %14 : vector<128xf32> to vector<1x128xf32>
    %16 = arith.mulf %13, %13 : vector<8x128xf32>
    %cst_12 = arith.constant dense<0.000000e+00> : vector<128xf32>
    %17 = vector.multi_reduction <add>, %16, %cst_12 [0] : vector<8x128xf32> to vector<128xf32>
    %18 = vector.shape_cast %17 : vector<128xf32> to vector<1x128xf32>
    %cst_13 = arith.constant 1.250000e-01 : f32
    %19 = vector.broadcast %cst_13 : f32 to vector<1x128xf32>
    %20 = arith.mulf %15, %19 : vector<1x128xf32>
    %cst_14 = arith.constant 1.250000e-01 : f32
    %21 = vector.broadcast %cst_14 : f32 to vector<1x128xf32>
    %22 = arith.mulf %18, %21 : vector<1x128xf32>
    %23 = arith.mulf %20, %20 : vector<1x128xf32>
    %24 = arith.subf %22, %23 : vector<1x128xf32>
    %cst_15 = arith.constant 0.000000e+00 : f32
    %25 = vector.broadcast %cst_15 : f32 to vector<1x128xf32>
    %26 = arith.maximumf %24, %25 : vector<1x128xf32>
    %27 = vector.broadcast %20 : vector<1x128xf32> to vector<8x128xf32>
    %28 = arith.subf %13, %27 : vector<8x128xf32>
    %cst_16 = arith.constant 9.99999974E-6 : f32
    %29 = vector.broadcast %cst_16 : f32 to vector<1x128xf32>
    %30 = arith.addf %26, %29 : vector<1x128xf32>
    %31 = math.rsqrt %30 : vector<1x128xf32>
    %32 = vector.broadcast %31 : vector<1x128xf32> to vector<8x128xf32>
    %33 = arith.mulf %28, %32 : vector<8x128xf32>
    %c0_17 = arith.constant 0 : index
    %c0_18 = arith.constant 0 : index
    %34 = vector.load %arg2[%c0_17, %c0_18] : memref<4x128xf32, #tpu.memory_space<vmem>>, vector<1x128xf32>
    %35 = vector.broadcast %34 : vector<1x128xf32> to vector<8x128xf32>
    %36 = arith.mulf %33, %35 : vector<8x128xf32>
    %c1_19 = arith.constant 1 : index
    %c0_20 = arith.constant 0 : index
    %37 = vector.load %arg2[%c1_19, %c0_20] : memref<4x128xf32, #tpu.memory_space<vmem>>, vector<1x128xf32>
    %38 = vector.broadcast %37 : vector<1x128xf32> to vector<8x128xf32>
    %39 = arith.addf %36, %38 : vector<8x128xf32>
    %cst_21 = arith.constant 0.000000e+00 : f32
    %40 = vector.broadcast %cst_21 : f32 to vector<8x128xf32>
    %41 = arith.cmpf ogt, %39, %40 : vector<8x128xf32>
    %42 = math.exp %39 : vector<8x128xf32>
    %cst_22 = arith.constant 1.000000e+00 : f32
    %43 = vector.broadcast %cst_22 : f32 to vector<8x128xf32>
    %44 = arith.subf %42, %43 : vector<8x128xf32>
    %45 = arith.select %41, %39, %44 : vector<8x128xi1>, vector<8x128xf32>
    %46 = arith.mulf %1, %3 : vector<8x128xf32>
    %c1_23 = arith.constant 1 : index
    %c0_24 = arith.constant 0 : index
    %c0_25 = arith.constant 0 : index
    %47 = vector.load %arg1[%c1_23, %c0_24, %c0_25] : memref<16x128x128xf32, #tpu.memory_space<vmem>>, vector<1x128x128xf32>
    %48 = vector.shape_cast %47 : vector<1x128x128xf32> to vector<128x128xf32>
    %cst_26 = arith.constant dense<0.000000e+00> : vector<8x128xf32>
    %49 = tpu.matmul %46, %48, %cst_26 {dimension_numbers = #tpu.dot_dimension_numbers<[1], [0], [0], [1], [0, 0, 1, 1], [], []>} : vector<8x128xf32>, vector<128x128xf32>, vector<8x128xf32> -> vector<8x128xf32>
    %50 = vector.extract_strided_slice %49 {offsets = [0, 0], sizes = [1, 128], strides = [1, 1]} : vector<8x128xf32> to vector<1x128xf32>
    %51 = vector.broadcast %50 : vector<1x128xf32> to vector<8x128xf32>
    %52 = arith.subf %49, %51 : vector<8x128xf32>
    %cst_27 = arith.constant dense<0.000000e+00> : vector<128xf32>
    %53 = vector.multi_reduction <add>, %52, %cst_27 [0] : vector<8x128xf32> to vector<128xf32>
    %54 = vector.shape_cast %53 : vector<128xf32> to vector<1x128xf32>
    %55 = arith.mulf %52, %52 : vector<8x128xf32>
    %cst_28 = arith.constant dense<0.000000e+00> : vector<128xf32>
    %56 = vector.multi_reduction <add>, %55, %cst_28 [0] : vector<8x128xf32> to vector<128xf32>
    %57 = vector.shape_cast %56 : vector<128xf32> to vector<1x128xf32>
    %cst_29 = arith.constant 1.250000e-01 : f32
    %58 = vector.broadcast %cst_29 : f32 to vector<1x128xf32>
    %59 = arith.mulf %54, %58 : vector<1x128xf32>
    %cst_30 = arith.constant 1.250000e-01 : f32
    %60 = vector.broadcast %cst_30 : f32 to vector<1x128xf32>
    %61 = arith.mulf %57, %60 : vector<1x128xf32>
    %62 = arith.mulf %59, %59 : vector<1x128xf32>
    %63 = arith.subf %61, %62 : vector<1x128xf32>
    %cst_31 = arith.constant 0.000000e+00 : f32
    %64 = vector.broadcast %cst_31 : f32 to vector<1x128xf32>
    %65 = arith.maximumf %63, %64 : vector<1x128xf32>
    %66 = vector.broadcast %59 : vector<1x128xf32> to vector<8x128xf32>
    %67 = arith.subf %52, %66 : vector<8x128xf32>
    %cst_32 = arith.constant 1.000000e-10 : f32
    %68 = vector.broadcast %cst_32 : f32 to vector<1x128xf32>
    %69 = arith.addf %65, %68 : vector<1x128xf32>
    %70 = math.rsqrt %69 : vector<1x128xf32>
    %71 = vector.broadcast %70 : vector<1x128xf32> to vector<8x128xf32>
    %72 = arith.mulf %67, %71 : vector<8x128xf32>
    %cst_33 = arith.constant 0.000000e+00 : f32
    %73 = vector.broadcast %cst_33 : f32 to vector<8x128xf32>
    %74 = arith.maximumf %72, %73 : vector<8x128xf32>
    %c2_34 = arith.constant 2 : index
    %c0_35 = arith.constant 0 : index
    %c0_36 = arith.constant 0 : index
    %75 = vector.load %arg1[%c2_34, %c0_35, %c0_36] : memref<16x128x128xf32, #tpu.memory_space<vmem>>, vector<1x128x128xf32>
    %76 = vector.shape_cast %75 : vector<1x128x128xf32> to vector<128x128xf32>
    %cst_37 = arith.constant dense<0.000000e+00> : vector<8x128xf32>
    %77 = tpu.matmul %74, %76, %cst_37 {dimension_numbers = #tpu.dot_dimension_numbers<[1], [0], [0], [1], [0, 0, 1, 1], [], []>} : vector<8x128xf32>, vector<128x128xf32>, vector<8x128xf32> -> vector<8x128xf32>
    %78 = vector.extract_strided_slice %77 {offsets = [0, 0], sizes = [1, 128], strides = [1, 1]} : vector<8x128xf32> to vector<1x128xf32>
    %79 = vector.broadcast %78 : vector<1x128xf32> to vector<8x128xf32>
    %80 = arith.subf %77, %79 : vector<8x128xf32>
    %cst_38 = arith.constant dense<0.000000e+00> : vector<128xf32>
    %81 = vector.multi_reduction <add>, %80, %cst_38 [0] : vector<8x128xf32> to vector<128xf32>
    %82 = vector.shape_cast %81 : vector<128xf32> to vector<1x128xf32>
    %83 = arith.mulf %80, %80 : vector<8x128xf32>
    %cst_39 = arith.constant dense<0.000000e+00> : vector<128xf32>
    %84 = vector.multi_reduction <add>, %83, %cst_39 [0] : vector<8x128xf32> to vector<128xf32>
    %85 = vector.shape_cast %84 : vector<128xf32> to vector<1x128xf32>
    %cst_40 = arith.constant 1.250000e-01 : f32
    %86 = vector.broadcast %cst_40 : f32 to vector<1x128xf32>
    %87 = arith.mulf %82, %86 : vector<1x128xf32>
    %cst_41 = arith.constant 1.250000e-01 : f32
    %88 = vector.broadcast %cst_41 : f32 to vector<1x128xf32>
    %89 = arith.mulf %85, %88 : vector<1x128xf32>
    %90 = arith.mulf %87, %87 : vector<1x128xf32>
    %91 = arith.subf %89, %90 : vector<1x128xf32>
    %cst_42 = arith.constant 0.000000e+00 : f32
    %92 = vector.broadcast %cst_42 : f32 to vector<1x128xf32>
    %93 = arith.maximumf %91, %92 : vector<1x128xf32>
    %94 = vector.broadcast %87 : vector<1x128xf32> to vector<8x128xf32>
    %95 = arith.subf %80, %94 : vector<8x128xf32>
    %cst_43 = arith.constant 1.000000e-10 : f32
    %96 = vector.broadcast %cst_43 : f32 to vector<1x128xf32>
    %97 = arith.addf %93, %96 : vector<1x128xf32>
    %98 = math.rsqrt %97 : vector<1x128xf32>
    %99 = vector.broadcast %98 : vector<1x128xf32> to vector<8x128xf32>
    %100 = arith.mulf %95, %99 : vector<8x128xf32>
    %cst_44 = arith.constant 0.000000e+00 : f32
    %101 = vector.broadcast %cst_44 : f32 to vector<8x128xf32>
    %102 = arith.maximumf %100, %101 : vector<8x128xf32>
    %c3_45 = arith.constant 3 : index
    %c0_46 = arith.constant 0 : index
    %c0_47 = arith.constant 0 : index
    %103 = vector.load %arg1[%c3_45, %c0_46, %c0_47] : memref<16x128x128xf32, #tpu.memory_space<vmem>>, vector<1x128x128xf32>
    %104 = vector.shape_cast %103 : vector<1x128x128xf32> to vector<128x128xf32>
    %cst_48 = arith.constant dense<0.000000e+00> : vector<8x128xf32>
    %105 = tpu.matmul %102, %104, %cst_48 {dimension_numbers = #tpu.dot_dimension_numbers<[1], [0], [0], [1], [0, 0, 1, 1], [], []>} : vector<8x128xf32>, vector<128x128xf32>, vector<8x128xf32> -> vector<8x128xf32>
    %106 = vector.extract_strided_slice %105 {offsets = [0, 0], sizes = [1, 128], strides = [1, 1]} : vector<8x128xf32> to vector<1x128xf32>
    %107 = vector.broadcast %106 : vector<1x128xf32> to vector<8x128xf32>
    %108 = arith.subf %105, %107 : vector<8x128xf32>
    %cst_49 = arith.constant dense<0.000000e+00> : vector<128xf32>
    %109 = vector.multi_reduction <add>, %108, %cst_49 [0] : vector<8x128xf32> to vector<128xf32>
    %110 = vector.shape_cast %109 : vector<128xf32> to vector<1x128xf32>
    %111 = arith.mulf %108, %108 : vector<8x128xf32>
    %cst_50 = arith.constant dense<0.000000e+00> : vector<128xf32>
    %112 = vector.multi_reduction <add>, %111, %cst_50 [0] : vector<8x128xf32> to vector<128xf32>
    %113 = vector.shape_cast %112 : vector<128xf32> to vector<1x128xf32>
    %cst_51 = arith.constant 1.250000e-01 : f32
    %114 = vector.broadcast %cst_51 : f32 to vector<1x128xf32>
    %115 = arith.mulf %110, %114 : vector<1x128xf32>
    %cst_52 = arith.constant 1.250000e-01 : f32
    %116 = vector.broadcast %cst_52 : f32 to vector<1x128xf32>
    %117 = arith.mulf %113, %116 : vector<1x128xf32>
    %118 = arith.mulf %115, %115 : vector<1x128xf32>
    %119 = arith.subf %117, %118 : vector<1x128xf32>
    %cst_53 = arith.constant 0.000000e+00 : f32
    %120 = vector.broadcast %cst_53 : f32 to vector<1x128xf32>
    %121 = arith.maximumf %119, %120 : vector<1x128xf32>
    %122 = vector.broadcast %115 : vector<1x128xf32> to vector<8x128xf32>
    %123 = arith.subf %108, %122 : vector<8x128xf32>
    %cst_54 = arith.constant 1.000000e-10 : f32
    %124 = vector.broadcast %cst_54 : f32 to vector<1x128xf32>
    %125 = arith.addf %121, %124 : vector<1x128xf32>
    %126 = math.rsqrt %125 : vector<1x128xf32>
    %127 = vector.broadcast %126 : vector<1x128xf32> to vector<8x128xf32>
    %128 = arith.mulf %123, %127 : vector<8x128xf32>
    %cst_55 = arith.constant 0.000000e+00 : f32
    %129 = vector.broadcast %cst_55 : f32 to vector<8x128xf32>
    %130 = arith.maximumf %128, %129 : vector<8x128xf32>
    %c4 = arith.constant 4 : index
    %c0_56 = arith.constant 0 : index
    %c0_57 = arith.constant 0 : index
    %131 = vector.load %arg1[%c4, %c0_56, %c0_57] : memref<16x128x128xf32, #tpu.memory_space<vmem>>, vector<1x128x128xf32>
    %132 = vector.shape_cast %131 : vector<1x128x128xf32> to vector<128x128xf32>
    %cst_58 = arith.constant dense<0.000000e+00> : vector<8x128xf32>
    %133 = tpu.matmul %130, %132, %cst_58 {dimension_numbers = #tpu.dot_dimension_numbers<[1], [0], [0], [1], [0, 0, 1, 1], [], []>} : vector<8x128xf32>, vector<128x128xf32>, vector<8x128xf32> -> vector<8x128xf32>
    %134 = vector.extract_strided_slice %133 {offsets = [0, 0], sizes = [1, 128], strides = [1, 1]} : vector<8x128xf32> to vector<1x128xf32>
    %135 = vector.broadcast %134 : vector<1x128xf32> to vector<8x128xf32>
    %136 = arith.subf %133, %135 : vector<8x128xf32>
    %cst_59 = arith.constant dense<0.000000e+00> : vector<128xf32>
    %137 = vector.multi_reduction <add>, %136, %cst_59 [0] : vector<8x128xf32> to vector<128xf32>
    %138 = vector.shape_cast %137 : vector<128xf32> to vector<1x128xf32>
    %139 = arith.mulf %136, %136 : vector<8x128xf32>
    %cst_60 = arith.constant dense<0.000000e+00> : vector<128xf32>
    %140 = vector.multi_reduction <add>, %139, %cst_60 [0] : vector<8x128xf32> to vector<128xf32>
    %141 = vector.shape_cast %140 : vector<128xf32> to vector<1x128xf32>
    %cst_61 = arith.constant 1.250000e-01 : f32
    %142 = vector.broadcast %cst_61 : f32 to vector<1x128xf32>
    %143 = arith.mulf %138, %142 : vector<1x128xf32>
    %cst_62 = arith.constant 1.250000e-01 : f32
    %144 = vector.broadcast %cst_62 : f32 to vector<1x128xf32>
    %145 = arith.mulf %141, %144 : vector<1x128xf32>
    %146 = arith.mulf %143, %143 : vector<1x128xf32>
    %147 = arith.subf %145, %146 : vector<1x128xf32>
    %cst_63 = arith.constant 0.000000e+00 : f32
    %148 = vector.broadcast %cst_63 : f32 to vector<1x128xf32>
    %149 = arith.maximumf %147, %148 : vector<1x128xf32>
    %150 = vector.broadcast %143 : vector<1x128xf32> to vector<8x128xf32>
    %151 = arith.subf %136, %150 : vector<8x128xf32>
    %cst_64 = arith.constant 1.000000e-10 : f32
    %152 = vector.broadcast %cst_64 : f32 to vector<1x128xf32>
    %153 = arith.addf %149, %152 : vector<1x128xf32>
    %154 = math.rsqrt %153 : vector<1x128xf32>
    %155 = vector.broadcast %154 : vector<1x128xf32> to vector<8x128xf32>
    %156 = arith.mulf %151, %155 : vector<8x128xf32>
    %cst_65 = arith.constant 0.000000e+00 : f32
    %157 = vector.broadcast %cst_65 : f32 to vector<8x128xf32>
    %158 = arith.maximumf %156, %157 : vector<8x128xf32>
    %c5 = arith.constant 5 : index
    %c0_66 = arith.constant 0 : index
    %c0_67 = arith.constant 0 : index
    %159 = vector.load %arg1[%c5, %c0_66, %c0_67] : memref<16x128x128xf32, #tpu.memory_space<vmem>>, vector<1x128x128xf32>
    %160 = vector.shape_cast %159 : vector<1x128x128xf32> to vector<128x128xf32>
    %cst_68 = arith.constant dense<0.000000e+00> : vector<8x128xf32>
    %161 = tpu.matmul %158, %160, %cst_68 {dimension_numbers = #tpu.dot_dimension_numbers<[1], [0], [0], [1], [0, 0, 1, 1], [], []>} : vector<8x128xf32>, vector<128x128xf32>, vector<8x128xf32> -> vector<8x128xf32>
    %c6 = arith.constant 6 : index
    %c0_69 = arith.constant 0 : index
    %c0_70 = arith.constant 0 : index
    %162 = vector.load %arg1[%c6, %c0_69, %c0_70] : memref<16x128x128xf32, #tpu.memory_space<vmem>>, vector<1x128x128xf32>
    %163 = vector.shape_cast %162 : vector<1x128x128xf32> to vector<128x128xf32>
    %cst_71 = arith.constant dense<0.000000e+00> : vector<8x128xf32>
    %164 = tpu.matmul %45, %163, %cst_71 {dimension_numbers = #tpu.dot_dimension_numbers<[1], [0], [0], [1], [0, 0, 1, 1], [], []>} : vector<8x128xf32>, vector<128x128xf32>, vector<8x128xf32> -> vector<8x128xf32>
    %165 = arith.addf %161, %164 : vector<8x128xf32>
    %166 = vector.extract_strided_slice %165 {offsets = [0, 0], sizes = [1, 128], strides = [1, 1]} : vector<8x128xf32> to vector<1x128xf32>
    %167 = vector.broadcast %166 : vector<1x128xf32> to vector<8x128xf32>
    %168 = arith.subf %165, %167 : vector<8x128xf32>
    %cst_72 = arith.constant dense<0.000000e+00> : vector<128xf32>
    %169 = vector.multi_reduction <add>, %168, %cst_72 [0] : vector<8x128xf32> to vector<128xf32>
    %170 = vector.shape_cast %169 : vector<128xf32> to vector<1x128xf32>
    %171 = arith.mulf %168, %168 : vector<8x128xf32>
    %cst_73 = arith.constant dense<0.000000e+00> : vector<128xf32>
    %172 = vector.multi_reduction <add>, %171, %cst_73 [0] : vector<8x128xf32> to vector<128xf32>
    %173 = vector.shape_cast %172 : vector<128xf32> to vector<1x128xf32>
    %cst_74 = arith.constant 1.250000e-01 : f32
    %174 = vector.broadcast %cst_74 : f32 to vector<1x128xf32>
    %175 = arith.mulf %170, %174 : vector<1x128xf32>
    %cst_75 = arith.constant 1.250000e-01 : f32
    %176 = vector.broadcast %cst_75 : f32 to vector<1x128xf32>
    %177 = arith.mulf %173, %176 : vector<1x128xf32>
    %178 = arith.mulf %175, %175 : vector<1x128xf32>
    %179 = arith.subf %177, %178 : vector<1x128xf32>
    %cst_76 = arith.constant 0.000000e+00 : f32
    %180 = vector.broadcast %cst_76 : f32 to vector<1x128xf32>
    %181 = arith.maximumf %179, %180 : vector<1x128xf32>
    %182 = vector.broadcast %175 : vector<1x128xf32> to vector<8x128xf32>
    %183 = arith.subf %168, %182 : vector<8x128xf32>
    %cst_77 = arith.constant 1.000000e-10 : f32
    %184 = vector.broadcast %cst_77 : f32 to vector<1x128xf32>
    %185 = arith.addf %181, %184 : vector<1x128xf32>
    %186 = math.rsqrt %185 : vector<1x128xf32>
    %187 = vector.broadcast %186 : vector<1x128xf32> to vector<8x128xf32>
    %188 = arith.mulf %183, %187 : vector<8x128xf32>
    %cst_78 = arith.constant 0.000000e+00 : f32
    %189 = vector.broadcast %cst_78 : f32 to vector<8x128xf32>
    %190 = arith.maximumf %188, %189 : vector<8x128xf32>
    %c8 = arith.constant 8 : index
    %c0_79 = arith.constant 0 : index
    %c0_80 = arith.constant 0 : index
    %191 = vector.load %arg1[%c8, %c0_79, %c0_80] : memref<16x128x128xf32, #tpu.memory_space<vmem>>, vector<1x128x128xf32>
    %192 = vector.shape_cast %191 : vector<1x128x128xf32> to vector<128x128xf32>
    %cst_81 = arith.constant dense<0.000000e+00> : vector<8x128xf32>
    %193 = tpu.matmul %190, %192, %cst_81 {dimension_numbers = #tpu.dot_dimension_numbers<[1], [0], [0], [1], [0, 0, 1, 1], [], []>} : vector<8x128xf32>, vector<128x128xf32>, vector<8x128xf32> -> vector<8x128xf32>
    %194 = vector.extract_strided_slice %193 {offsets = [0, 0], sizes = [1, 128], strides = [1, 1]} : vector<8x128xf32> to vector<1x128xf32>
    %195 = vector.broadcast %194 : vector<1x128xf32> to vector<8x128xf32>
    %196 = arith.subf %193, %195 : vector<8x128xf32>
    %cst_82 = arith.constant dense<0.000000e+00> : vector<128xf32>
    %197 = vector.multi_reduction <add>, %196, %cst_82 [0] : vector<8x128xf32> to vector<128xf32>
    %198 = vector.shape_cast %197 : vector<128xf32> to vector<1x128xf32>
    %199 = arith.mulf %196, %196 : vector<8x128xf32>
    %cst_83 = arith.constant dense<0.000000e+00> : vector<128xf32>
    %200 = vector.multi_reduction <add>, %199, %cst_83 [0] : vector<8x128xf32> to vector<128xf32>
    %201 = vector.shape_cast %200 : vector<128xf32> to vector<1x128xf32>
    %cst_84 = arith.constant 1.250000e-01 : f32
    %202 = vector.broadcast %cst_84 : f32 to vector<1x128xf32>
    %203 = arith.mulf %198, %202 : vector<1x128xf32>
    %cst_85 = arith.constant 1.250000e-01 : f32
    %204 = vector.broadcast %cst_85 : f32 to vector<1x128xf32>
    %205 = arith.mulf %201, %204 : vector<1x128xf32>
    %206 = arith.mulf %203, %203 : vector<1x128xf32>
    %207 = arith.subf %205, %206 : vector<1x128xf32>
    %cst_86 = arith.constant 0.000000e+00 : f32
    %208 = vector.broadcast %cst_86 : f32 to vector<1x128xf32>
    %209 = arith.maximumf %207, %208 : vector<1x128xf32>
    %210 = vector.broadcast %203 : vector<1x128xf32> to vector<8x128xf32>
    %211 = arith.subf %196, %210 : vector<8x128xf32>
    %cst_87 = arith.constant 1.000000e-10 : f32
    %212 = vector.broadcast %cst_87 : f32 to vector<1x128xf32>
    %213 = arith.addf %209, %212 : vector<1x128xf32>
    %214 = math.rsqrt %213 : vector<1x128xf32>
    %215 = vector.broadcast %214 : vector<1x128xf32> to vector<8x128xf32>
    %216 = arith.mulf %211, %215 : vector<8x128xf32>
    %c9 = arith.constant 9 : index
    %c0_88 = arith.constant 0 : index
    %c0_89 = arith.constant 0 : index
    %217 = vector.load %arg1[%c9, %c0_88, %c0_89] : memref<16x128x128xf32, #tpu.memory_space<vmem>>, vector<1x128x128xf32>
    %218 = vector.shape_cast %217 : vector<1x128x128xf32> to vector<128x128xf32>
    %cst_90 = arith.constant dense<0.000000e+00> : vector<8x128xf32>
    %219 = tpu.matmul %190, %218, %cst_90 {dimension_numbers = #tpu.dot_dimension_numbers<[1], [0], [0], [1], [0, 0, 1, 1], [], []>} : vector<8x128xf32>, vector<128x128xf32>, vector<8x128xf32> -> vector<8x128xf32>
    %c2_91 = arith.constant 2 : index
    %c0_92 = arith.constant 0 : index
    %220 = vector.load %arg2[%c2_91, %c0_92] : memref<4x128xf32, #tpu.memory_space<vmem>>, vector<1x128xf32>
    %221 = vector.broadcast %220 : vector<1x128xf32> to vector<8x128xf32>
    %222 = arith.addf %219, %221 : vector<8x128xf32>
    %cst_93 = arith.constant 0.000000e+00 : f32
    %223 = vector.broadcast %cst_93 : f32 to vector<8x128xf32>
    %224 = arith.subf %223, %222 : vector<8x128xf32>
    %225 = math.exp %224 : vector<8x128xf32>
    %cst_94 = arith.constant 1.000000e+00 : f32
    %226 = vector.broadcast %cst_94 : f32 to vector<8x128xf32>
    %227 = arith.addf %226, %225 : vector<8x128xf32>
    %228 = tpu.reciprocal %227 {approx = true} : vector<8x128xf32> -> vector<8x128xf32>
    %229 = arith.mulf %228, %7 : vector<8x128xf32>
    %230 = arith.addf %216, %229 : vector<8x128xf32>
    %c10 = arith.constant 10 : index
    %c0_95 = arith.constant 0 : index
    %c0_96 = arith.constant 0 : index
    %231 = vector.load %arg1[%c10, %c0_95, %c0_96] : memref<16x128x128xf32, #tpu.memory_space<vmem>>, vector<1x128x128xf32>
    %232 = vector.shape_cast %231 : vector<1x128x128xf32> to vector<128x128xf32>
    %cst_97 = arith.constant dense<0.000000e+00> : vector<8x128xf32>
    %233 = tpu.matmul %230, %232, %cst_97 {dimension_numbers = #tpu.dot_dimension_numbers<[1], [0], [0], [1], [0, 0, 1, 1], [], []>} : vector<8x128xf32>, vector<128x128xf32>, vector<8x128xf32> -> vector<8x128xf32>
    %234 = vector.extract_strided_slice %233 {offsets = [0, 0], sizes = [1, 128], strides = [1, 1]} : vector<8x128xf32> to vector<1x128xf32>
    %235 = vector.broadcast %234 : vector<1x128xf32> to vector<8x128xf32>
    %236 = arith.subf %233, %235 : vector<8x128xf32>
    %cst_98 = arith.constant dense<0.000000e+00> : vector<128xf32>
    %237 = vector.multi_reduction <add>, %236, %cst_98 [0] : vector<8x128xf32> to vector<128xf32>
    %238 = vector.shape_cast %237 : vector<128xf32> to vector<1x128xf32>
    %239 = arith.mulf %236, %236 : vector<8x128xf32>
    %cst_99 = arith.constant dense<0.000000e+00> : vector<128xf32>
    %240 = vector.multi_reduction <add>, %239, %cst_99 [0] : vector<8x128xf32> to vector<128xf32>
    %241 = vector.shape_cast %240 : vector<128xf32> to vector<1x128xf32>
    %cst_100 = arith.constant 1.250000e-01 : f32
    %242 = vector.broadcast %cst_100 : f32 to vector<1x128xf32>
    %243 = arith.mulf %238, %242 : vector<1x128xf32>
    %cst_101 = arith.constant 1.250000e-01 : f32
    %244 = vector.broadcast %cst_101 : f32 to vector<1x128xf32>
    %245 = arith.mulf %241, %244 : vector<1x128xf32>
    %246 = arith.mulf %243, %243 : vector<1x128xf32>
    %247 = arith.subf %245, %246 : vector<1x128xf32>
    %cst_102 = arith.constant 0.000000e+00 : f32
    %248 = vector.broadcast %cst_102 : f32 to vector<1x128xf32>
    %249 = arith.maximumf %247, %248 : vector<1x128xf32>
    %250 = vector.broadcast %243 : vector<1x128xf32> to vector<8x128xf32>
    %251 = arith.subf %236, %250 : vector<8x128xf32>
    %cst_103 = arith.constant 1.000000e-10 : f32
    %252 = vector.broadcast %cst_103 : f32 to vector<1x128xf32>
    %253 = arith.addf %249, %252 : vector<1x128xf32>
    %254 = math.rsqrt %253 : vector<1x128xf32>
    %255 = vector.broadcast %254 : vector<1x128xf32> to vector<8x128xf32>
    %256 = arith.mulf %251, %255 : vector<8x128xf32>
    %cst_104 = arith.constant 0.000000e+00 : f32
    %257 = vector.broadcast %cst_104 : f32 to vector<8x128xf32>
    %258 = arith.maximumf %256, %257 : vector<8x128xf32>
    %c11 = arith.constant 11 : index
    %c0_105 = arith.constant 0 : index
    %c0_106 = arith.constant 0 : index
    %259 = vector.load %arg1[%c11, %c0_105, %c0_106] : memref<16x128x128xf32, #tpu.memory_space<vmem>>, vector<1x128x128xf32>
    %260 = vector.shape_cast %259 : vector<1x128x128xf32> to vector<128x128xf32>
    %cst_107 = arith.constant dense<0.000000e+00> : vector<8x128xf32>
    %261 = tpu.matmul %258, %260, %cst_107 {dimension_numbers = #tpu.dot_dimension_numbers<[1], [0], [0], [1], [0, 0, 1, 1], [], []>} : vector<8x128xf32>, vector<128x128xf32>, vector<8x128xf32> -> vector<8x128xf32>
    %262 = vector.extract_strided_slice %261 {offsets = [0, 0], sizes = [1, 128], strides = [1, 1]} : vector<8x128xf32> to vector<1x128xf32>
    %263 = vector.broadcast %262 : vector<1x128xf32> to vector<8x128xf32>
    %264 = arith.subf %261, %263 : vector<8x128xf32>
    %cst_108 = arith.constant dense<0.000000e+00> : vector<128xf32>
    %265 = vector.multi_reduction <add>, %264, %cst_108 [0] : vector<8x128xf32> to vector<128xf32>
    %266 = vector.shape_cast %265 : vector<128xf32> to vector<1x128xf32>
    %267 = arith.mulf %264, %264 : vector<8x128xf32>
    %cst_109 = arith.constant dense<0.000000e+00> : vector<128xf32>
    %268 = vector.multi_reduction <add>, %267, %cst_109 [0] : vector<8x128xf32> to vector<128xf32>
    %269 = vector.shape_cast %268 : vector<128xf32> to vector<1x128xf32>
    %cst_110 = arith.constant 1.250000e-01 : f32
    %270 = vector.broadcast %cst_110 : f32 to vector<1x128xf32>
    %271 = arith.mulf %266, %270 : vector<1x128xf32>
    %cst_111 = arith.constant 1.250000e-01 : f32
    %272 = vector.broadcast %cst_111 : f32 to vector<1x128xf32>
    %273 = arith.mulf %269, %272 : vector<1x128xf32>
    %274 = arith.mulf %271, %271 : vector<1x128xf32>
    %275 = arith.subf %273, %274 : vector<1x128xf32>
    %cst_112 = arith.constant 0.000000e+00 : f32
    %276 = vector.broadcast %cst_112 : f32 to vector<1x128xf32>
    %277 = arith.maximumf %275, %276 : vector<1x128xf32>
    %278 = vector.broadcast %271 : vector<1x128xf32> to vector<8x128xf32>
    %279 = arith.subf %264, %278 : vector<8x128xf32>
    %cst_113 = arith.constant 1.000000e-10 : f32
    %280 = vector.broadcast %cst_113 : f32 to vector<1x128xf32>
    %281 = arith.addf %277, %280 : vector<1x128xf32>
    %282 = math.rsqrt %281 : vector<1x128xf32>
    %283 = vector.broadcast %282 : vector<1x128xf32> to vector<8x128xf32>
    %284 = arith.mulf %279, %283 : vector<8x128xf32>
    %cst_114 = arith.constant 0.000000e+00 : f32
    %285 = vector.broadcast %cst_114 : f32 to vector<8x128xf32>
    %286 = arith.maximumf %284, %285 : vector<8x128xf32>
    %c12 = arith.constant 12 : index
    %c0_115 = arith.constant 0 : index
    %c0_116 = arith.constant 0 : index
    %287 = vector.load %arg1[%c12, %c0_115, %c0_116] : memref<16x128x128xf32, #tpu.memory_space<vmem>>, vector<1x128x128xf32>
    %288 = vector.shape_cast %287 : vector<1x128x128xf32> to vector<128x128xf32>
    %cst_117 = arith.constant dense<0.000000e+00> : vector<8x128xf32>
    %289 = tpu.matmul %286, %288, %cst_117 {dimension_numbers = #tpu.dot_dimension_numbers<[1], [0], [0], [1], [0, 0, 1, 1], [], []>} : vector<8x128xf32>, vector<128x128xf32>, vector<8x128xf32> -> vector<8x128xf32>
    %290 = vector.extract_strided_slice %289 {offsets = [0, 0], sizes = [1, 128], strides = [1, 1]} : vector<8x128xf32> to vector<1x128xf32>
    %291 = vector.broadcast %290 : vector<1x128xf32> to vector<8x128xf32>
    %292 = arith.subf %289, %291 : vector<8x128xf32>
    %cst_118 = arith.constant dense<0.000000e+00> : vector<128xf32>
    %293 = vector.multi_reduction <add>, %292, %cst_118 [0] : vector<8x128xf32> to vector<128xf32>
    %294 = vector.shape_cast %293 : vector<128xf32> to vector<1x128xf32>
    %295 = arith.mulf %292, %292 : vector<8x128xf32>
    %cst_119 = arith.constant dense<0.000000e+00> : vector<128xf32>
    %296 = vector.multi_reduction <add>, %295, %cst_119 [0] : vector<8x128xf32> to vector<128xf32>
    %297 = vector.shape_cast %296 : vector<128xf32> to vector<1x128xf32>
    %cst_120 = arith.constant 1.250000e-01 : f32
    %298 = vector.broadcast %cst_120 : f32 to vector<1x128xf32>
    %299 = arith.mulf %294, %298 : vector<1x128xf32>
    %cst_121 = arith.constant 1.250000e-01 : f32
    %300 = vector.broadcast %cst_121 : f32 to vector<1x128xf32>
    %301 = arith.mulf %297, %300 : vector<1x128xf32>
    %302 = arith.mulf %299, %299 : vector<1x128xf32>
    %303 = arith.subf %301, %302 : vector<1x128xf32>
    %cst_122 = arith.constant 0.000000e+00 : f32
    %304 = vector.broadcast %cst_122 : f32 to vector<1x128xf32>
    %305 = arith.maximumf %303, %304 : vector<1x128xf32>
    %306 = vector.broadcast %299 : vector<1x128xf32> to vector<8x128xf32>
    %307 = arith.subf %292, %306 : vector<8x128xf32>
    %cst_123 = arith.constant 1.000000e-10 : f32
    %308 = vector.broadcast %cst_123 : f32 to vector<1x128xf32>
    %309 = arith.addf %305, %308 : vector<1x128xf32>
    %310 = math.rsqrt %309 : vector<1x128xf32>
    %311 = vector.broadcast %310 : vector<1x128xf32> to vector<8x128xf32>
    %312 = arith.mulf %307, %311 : vector<8x128xf32>
    %cst_124 = arith.constant 0.000000e+00 : f32
    %313 = vector.broadcast %cst_124 : f32 to vector<8x128xf32>
    %314 = arith.maximumf %312, %313 : vector<8x128xf32>
    %c13 = arith.constant 13 : index
    %c0_125 = arith.constant 0 : index
    %c0_126 = arith.constant 0 : index
    %315 = vector.load %arg1[%c13, %c0_125, %c0_126] : memref<16x128x128xf32, #tpu.memory_space<vmem>>, vector<1x128x128xf32>
    %316 = vector.shape_cast %315 : vector<1x128x128xf32> to vector<128x128xf32>
    %cst_127 = arith.constant dense<0.000000e+00> : vector<8x128xf32>
    %317 = tpu.matmul %314, %316, %cst_127 {dimension_numbers = #tpu.dot_dimension_numbers<[1], [0], [0], [1], [0, 0, 1, 1], [], []>} : vector<8x128xf32>, vector<128x128xf32>, vector<8x128xf32> -> vector<8x128xf32>
    %318 = vector.extract_strided_slice %317 {offsets = [0, 0], sizes = [1, 128], strides = [1, 1]} : vector<8x128xf32> to vector<1x128xf32>
    %319 = vector.broadcast %318 : vector<1x128xf32> to vector<8x128xf32>
    %320 = arith.subf %317, %319 : vector<8x128xf32>
    %cst_128 = arith.constant dense<0.000000e+00> : vector<128xf32>
    %321 = vector.multi_reduction <add>, %320, %cst_128 [0] : vector<8x128xf32> to vector<128xf32>
    %322 = vector.shape_cast %321 : vector<128xf32> to vector<1x128xf32>
    %323 = arith.mulf %320, %320 : vector<8x128xf32>
    %cst_129 = arith.constant dense<0.000000e+00> : vector<128xf32>
    %324 = vector.multi_reduction <add>, %323, %cst_129 [0] : vector<8x128xf32> to vector<128xf32>
    %325 = vector.shape_cast %324 : vector<128xf32> to vector<1x128xf32>
    %cst_130 = arith.constant 1.250000e-01 : f32
    %326 = vector.broadcast %cst_130 : f32 to vector<1x128xf32>
    %327 = arith.mulf %322, %326 : vector<1x128xf32>
    %cst_131 = arith.constant 1.250000e-01 : f32
    %328 = vector.broadcast %cst_131 : f32 to vector<1x128xf32>
    %329 = arith.mulf %325, %328 : vector<1x128xf32>
    %330 = arith.mulf %327, %327 : vector<1x128xf32>
    %331 = arith.subf %329, %330 : vector<1x128xf32>
    %cst_132 = arith.constant 0.000000e+00 : f32
    %332 = vector.broadcast %cst_132 : f32 to vector<1x128xf32>
    %333 = arith.maximumf %331, %332 : vector<1x128xf32>
    %334 = vector.broadcast %327 : vector<1x128xf32> to vector<8x128xf32>
    %335 = arith.subf %320, %334 : vector<8x128xf32>
    %cst_133 = arith.constant 1.000000e-10 : f32
    %336 = vector.broadcast %cst_133 : f32 to vector<1x128xf32>
    %337 = arith.addf %333, %336 : vector<1x128xf32>
    %338 = math.rsqrt %337 : vector<1x128xf32>
    %339 = vector.broadcast %338 : vector<1x128xf32> to vector<8x128xf32>
    %340 = arith.mulf %335, %339 : vector<8x128xf32>
    %cst_134 = arith.constant 0.000000e+00 : f32
    %341 = vector.broadcast %cst_134 : f32 to vector<8x128xf32>
    %342 = arith.maximumf %340, %341 : vector<8x128xf32>
    %c14 = arith.constant 14 : index
    %c0_135 = arith.constant 0 : index
    %c0_136 = arith.constant 0 : index
    %343 = vector.load %arg1[%c14, %c0_135, %c0_136] : memref<16x128x128xf32, #tpu.memory_space<vmem>>, vector<1x128x128xf32>
    %344 = vector.shape_cast %343 : vector<1x128x128xf32> to vector<128x128xf32>
    %cst_137 = arith.constant dense<0.000000e+00> : vector<8x128xf32>
    %345 = tpu.matmul %342, %344, %cst_137 {dimension_numbers = #tpu.dot_dimension_numbers<[1], [0], [0], [1], [0, 0, 1, 1], [], []>} : vector<8x128xf32>, vector<128x128xf32>, vector<8x128xf32> -> vector<8x128xf32>
    %346 = vector.extract_strided_slice %345 {offsets = [0, 0], sizes = [1, 128], strides = [1, 1]} : vector<8x128xf32> to vector<1x128xf32>
    %347 = vector.broadcast %346 : vector<1x128xf32> to vector<8x128xf32>
    %348 = arith.subf %345, %347 : vector<8x128xf32>
    %cst_138 = arith.constant dense<0.000000e+00> : vector<128xf32>
    %349 = vector.multi_reduction <add>, %348, %cst_138 [0] : vector<8x128xf32> to vector<128xf32>
    %350 = vector.shape_cast %349 : vector<128xf32> to vector<1x128xf32>
    %351 = arith.mulf %348, %348 : vector<8x128xf32>
    %cst_139 = arith.constant dense<0.000000e+00> : vector<128xf32>
    %352 = vector.multi_reduction <add>, %351, %cst_139 [0] : vector<8x128xf32> to vector<128xf32>
    %353 = vector.shape_cast %352 : vector<128xf32> to vector<1x128xf32>
    %cst_140 = arith.constant 1.250000e-01 : f32
    %354 = vector.broadcast %cst_140 : f32 to vector<1x128xf32>
    %355 = arith.mulf %350, %354 : vector<1x128xf32>
    %cst_141 = arith.constant 1.250000e-01 : f32
    %356 = vector.broadcast %cst_141 : f32 to vector<1x128xf32>
    %357 = arith.mulf %353, %356 : vector<1x128xf32>
    %358 = arith.mulf %355, %355 : vector<1x128xf32>
    %359 = arith.subf %357, %358 : vector<1x128xf32>
    %cst_142 = arith.constant 0.000000e+00 : f32
    %360 = vector.broadcast %cst_142 : f32 to vector<1x128xf32>
    %361 = arith.maximumf %359, %360 : vector<1x128xf32>
    %362 = vector.broadcast %355 : vector<1x128xf32> to vector<8x128xf32>
    %363 = arith.subf %348, %362 : vector<8x128xf32>
    %cst_143 = arith.constant 1.000000e-10 : f32
    %364 = vector.broadcast %cst_143 : f32 to vector<1x128xf32>
    %365 = arith.addf %361, %364 : vector<1x128xf32>
    %366 = math.rsqrt %365 : vector<1x128xf32>
    %367 = vector.broadcast %366 : vector<1x128xf32> to vector<8x128xf32>
    %368 = arith.mulf %363, %367 : vector<8x128xf32>
    %cst_144 = arith.constant 0.000000e+00 : f32
    %369 = vector.broadcast %cst_144 : f32 to vector<8x128xf32>
    %370 = arith.maximumf %368, %369 : vector<8x128xf32>
    %c15 = arith.constant 15 : index
    %c0_145 = arith.constant 0 : index
    %c0_146 = arith.constant 0 : index
    %371 = vector.load %arg1[%c15, %c0_145, %c0_146] : memref<16x128x128xf32, #tpu.memory_space<vmem>>, vector<1x128x128xf32>
    %372 = vector.shape_cast %371 : vector<1x128x128xf32> to vector<128x128xf32>
    %cst_147 = arith.constant dense<0.000000e+00> : vector<8x128xf32>
    %373 = tpu.matmul %370, %372, %cst_147 {dimension_numbers = #tpu.dot_dimension_numbers<[1], [0], [0], [1], [0, 0, 1, 1], [], []>} : vector<8x128xf32>, vector<128x128xf32>, vector<8x128xf32> -> vector<8x128xf32>
    %c3_148 = arith.constant 3 : index
    %c0_149 = arith.constant 0 : index
    %374 = vector.load %arg2[%c3_148, %c0_149] : memref<4x128xf32, #tpu.memory_space<vmem>>, vector<1x128xf32>
    %375 = vector.broadcast %374 : vector<1x128xf32> to vector<8x128xf32>
    %376 = arith.addf %373, %375 : vector<8x128xf32>
    %cst_150 = arith.constant 0.000000e+00 : f32
    %377 = vector.broadcast %cst_150 : f32 to vector<8x128xf32>
    %378 = arith.maximumf %376, %377 : vector<8x128xf32>
    %379 = arith.addf %230, %378 : vector<8x128xf32>
    %c0_151 = arith.constant 0 : index
    %c0_152 = arith.constant 0 : index
    %380 = vector.load %arg3[%c0_151, %c0_152] : memref<8x128xf32, #tpu.memory_space<vmem>>, vector<8x128xf32>
    tpu.vector_store %arg3[%c0_151, %c0_152], %379 {strides = array<i32>} : memref<8x128xf32, #tpu.memory_space<vmem>>, vector<8x128xf32>,
    return
  }
}

</mosaic_0001>

<llo_original>
// kernel: tpu_custom_call.1
$region0: #{tpu_custom_call.1}
  #allocation0 [shape = 'u32[]', space=smem, size = 0x4, offset = 0x4, fixed_abs, tag = 'smem constant byte address 0x4 - core index']
  #allocation1 [shape = 'u32[144,128]{1,0:T(1,128)}', space=vmem, size = 0x12000, scoped, tag = 'internal scratch']
  %s0 = inlined_call_operand.hbm [shape: f32[4,8,128], index: 0, kind: input, shape index: {}]
  %s1 = inlined_call_operand.hbm [shape: f32[16,128,128], index: 1, kind: input, shape index: {}]
  %s2 = inlined_call_operand.vmem [shape: f32[4,128], index: 2, kind: input, shape index: {}]
  %s3 = inlined_call_operand.hbm [shape: f32[8,128], index: 3, kind: output, shape index: {}]
  %s4 = sld [smem:[#allocation0]]
  $region30: #{tpu_custom_call.1} parent=0
    _
  %s6 = ssub.s32 1, %s4
  %s7 = scalar_select 0, %s6, %s4
  $region1: #{tpu_custom_call.1} parent=0
    #allocation2 [shape = 'u8[16384]{0}', space=vmem, size = 0x4000, scoped, tag = 'input window, operand 0, single buffered']
    #allocation3 [shape = 's32[1]{0}', space=sflag, size = 0x4, scoped, tag = 'scoped memory for tpu_custom_call.1']
    #allocation4 [shape = 's32[1]{0}', space=sflag, size = 0x4, scoped, tag = 'scoped memory for tpu_custom_call.1']
    #allocation5 [shape = 'u8[1048576]{0}', space=vmem, size = 0x100000, scoped, tag = 'input window, operand 1, single buffered']
    #allocation6 [shape = 's32[1]{0}', space=sflag, size = 0x4, scoped, tag = 'scoped memory for tpu_custom_call.1']
    #allocation7 [shape = 'u8[4096]{0}', space=vmem, size = 0x1000, scoped, tag = 'output window, operand 0, single buffered']
    %8 = vsyncpa [#allocation3], 0
    %9 = vsyncpa [#allocation6], 0
    %10 = vsyncpa [#allocation4], 0
    // Predicated region
    $region2: #{tpu_custom_call.1} parent=1 // pred_check
      _
    $region3: #{tpu_custom_call.1} parent=1 // pred_check_branch
      %12 = sbr.rel (0) target = $region5
    $region4: #{tpu_custom_call.1} parent=1 // pred_region
      %s14 = ssub.s32 512, 512
      %15 = vsyncadd [#allocation3], %s14
      %s16 = sshll.u32 [#allocation2], 4
      %s17 = int_to_ptr.vmem [resolvable:$true] %s16
      %22 = dma.hbm_to_vmem [thread:$0]  %s0, 512, %s17, [#allocation3], 128, 128, 8
    $region5: #{tpu_custom_call.1} parent=1 // pred_fallthru
      _
    // Predicated region
    $region6: #{tpu_custom_call.1} parent=1 // pred_check
      _
    $region7: #{tpu_custom_call.1} parent=1 // pred_check_branch
      %24 = sbr.rel (0) target = $region9
    $region8: #{tpu_custom_call.1} parent=1 // pred_region
      %s26 = ssub.s32 32768, 32768
      %27 = vsyncadd [#allocation6], %s26
      %s28 = sshll.u32 [#allocation5], 4
      %s29 = int_to_ptr.vmem [resolvable:$true] %s28
      %34 = dma.hbm_to_vmem [thread:$0]  %s1, 32768, %s29, [#allocation6], 128, 128, 8
    $region9: #{tpu_custom_call.1} parent=1 // pred_fallthru
      _
    // Predicated region
    $region10: #{tpu_custom_call.1} parent=1 // pred_check
      _
    $region11: #{tpu_custom_call.1} parent=1 // pred_check_branch
      %36 = sbr.rel (0) target = $region13
    $region12: #{tpu_custom_call.1} parent=1 // pred_region
      _
    $region13: #{tpu_custom_call.1} parent=1 // pred_fallthru
      _
    // Predicated region
    $region14: #{tpu_custom_call.1} parent=1 // pred_check
      _
    $region15: #{tpu_custom_call.1} parent=1 // pred_check_branch
      %38 = sbr.rel (0) target = $region17
    $region16: #{tpu_custom_call.1} parent=1 // pred_region
      %39 = dma.done [#allocation3], 512
    $region17: #{tpu_custom_call.1} parent=1 // pred_fallthru
      _
    // Predicated region
    $region18: #{tpu_custom_call.1} parent=1 // pred_check
      _
    $region19: #{tpu_custom_call.1} parent=1 // pred_check_branch
      %41 = sbr.rel (0) target = $region21
    $region20: #{tpu_custom_call.1} parent=1 // pred_region
      %42 = dma.done [#allocation6], 32768
    $region21: #{tpu_custom_call.1} parent=1 // pred_fallthru
      _
    %v43 = vld [vmem:[#allocation2] sm:$0xff]
    %s44 = scalar_lea.vmem [#allocation2], 8
    %v45 = vld [vmem:[%s44] sm:$0xff]
    %s46 = scalar_lea.vmem [#allocation2], 16
    %v47 = vld [vmem:[%s46] sm:$0xff]
    %s48 = scalar_lea.vmem [#allocation2], 24
    %v49 = vld [vmem:[%s48] sm:$0xff]
    %v50 = vld [vmem:[#allocation5] sm:$0xff]
    %v51 = vld [vmem:[#allocation5 + $0x8] sm:$0xff]
    %v52 = vld [vmem:[#allocation5 + $0x10] sm:$0xff]
    %v53 = vld [vmem:[#allocation5 + $0x18] sm:$0xff]
    %v54 = vld [vmem:[#allocation5 + $0x20] sm:$0xff]
    %v55 = vld [vmem:[#allocation5 + $0x28] sm:$0xff]
    %v56 = vld [vmem:[#allocation5 + $0x30] sm:$0xff]
    %v57 = vld [vmem:[#allocation5 + $0x38] sm:$0xff]
    %v58 = vld [vmem:[#allocation5 + $0x40] sm:$0xff]
    %v59 = vld [vmem:[#allocation5 + $0x48] sm:$0xff]
    %v60 = vld [vmem:[#allocation5 + $0x50] sm:$0xff]
    %v61 = vld [vmem:[#allocation5 + $0x58] sm:$0xff]
    %v62 = vld [vmem:[#allocation5 + $0x60] sm:$0xff]
    %v63 = vld [vmem:[#allocation5 + $0x68] sm:$0xff]
    %v64 = vld [vmem:[#allocation5 + $0x70] sm:$0xff]
    %v65 = vld [vmem:[#allocation5 + $0x78] sm:$0xff]
    %66 = vmatprep.subr.mxu0 0.0
    %67 = vmatpush1.msra.mxu0 %v50
    %68 = vmatprep.subr.mxu0 0.0
    %69 = vmatpush1.msra.mxu0 %v51
    %70 = vmatprep.subr.mxu0 0.0
    %71 = vmatpush1.msra.mxu0 %v52
    %72 = vmatprep.subr.mxu0 0.0
    %73 = vmatpush1.msra.mxu0 %v53
    %74 = vmatprep.subr.mxu0 0.0
    %75 = vmatpush1.msra.mxu0 %v54
    %76 = vmatprep.subr.mxu0 0.0
    %77 = vmatpush1.msra.mxu0 %v55
    %78 = vmatprep.subr.mxu0 0.0
    %79 = vmatpush1.msra.mxu0 %v56
    %80 = vmatprep.subr.mxu0 0.0
    %81 = vmatpush1.msra.mxu0 %v57
    %82 = vmatprep.subr.mxu0 0.0
    %83 = vmatpush1.msra.mxu0 %v58
    %84 = vmatprep.subr.mxu0 0.0
    %85 = vmatpush1.msra.mxu0 %v59
    %86 = vmatprep.subr.mxu0 0.0
    %87 = vmatpush1.msra.mxu0 %v60
    %88 = vmatprep.subr.mxu0 0.0
    %89 = vmatpush1.msra.mxu0 %v61
    %90 = vmatprep.subr.mxu0 0.0
    %91 = vmatpush1.msra.mxu0 %v62
    %92 = vmatprep.subr.mxu0 0.0
    %93 = vmatpush1.msra.mxu0 %v63
    %94 = vmatprep.subr.mxu0 0.0
    %95 = vmatpush1.msra.mxu0 %v64
    %96 = vmatprep.subr.mxu0 0.0
    %97 = vmatpush1.msra.mxu0 %v65
    %98 = vmatprep.subr.mxu0 0.0
    %99 = vmatpush1.msra.mxu0 0.0
    %100 = vmatprep.subr.mxu0 0.0
    %101 = vmatpush1.msra.mxu0 0.0
    %102 = vmatprep.subr.mxu0 0.0
    %103 = vmatpush1.msra.mxu0 0.0
    %104 = vmatprep.subr.mxu0 0.0
    %105 = vmatpush1.msra.mxu0 0.0
    %106 = vmatprep.subr.mxu0 0.0
    %107 = vmatpush1.msra.mxu0 0.0
    %108 = vmatprep.subr.mxu0 0.0
    %109 = vmatpush1.msra.mxu0 0.0
    %110 = vmatprep.subr.mxu0 0.0
    %111 = vmatpush1.msra.mxu0 0.0
    %112 = vmatprep.subr.mxu0 0.0
    %113 = vmatpush1.msra.mxu0 0.0
    %114 = vmatprep.subr.mxu0 0.0
    %115 = vmatpush1.msra.mxu0 0.0
    %116 = vmatprep.subr.mxu0 0.0
    %117 = vmatpush1.msra.mxu0 0.0
    %118 = vmatprep.subr.mxu0 0.0
    %119 = vmatpush1.msra.mxu0 0.0
    %120 = vmatprep.subr.mxu0 0.0
    %121 = vmatpush1.msra.mxu0 0.0
    %122 = vmatprep.subr.mxu0 0.0
    %123 = vmatpush1.msra.mxu0 0.0
    %124 = vmatprep.subr.mxu0 0.0
    %125 = vmatpush1.msra.mxu0 0.0
    %126 = vmatprep.subr.mxu0 0.0
    %127 = vmatpush1.msra.mxu0 0.0
    %128 = vmatprep.subr.mxu0 0.0
    %129 = vmatpush1.msra.mxu0 0.0
    %130 = vmatprep.mubr.f32.mxu0 0.0
    %131 = vmatmul.mubr.f32.gmra.mrb[0].mxu0 %v47
    %v132 = vpop.f32.mrb[0].mxu0
    %v133 = vadd.f32 0.0, %v132
    %v134 = vpop.f32.mrb[0].mxu0
    %135 = vdwg.mxu0
    %v136 = vlaneseq
    %v137 = vshrl.u32 %v136, 7
    %v138 = vsub.s32 0, %v137
    %v139 = vrot.slane %v133, %v138
    %v140 = vsub.f32 %v133, %v139
    %v141 = vrot.slane %v140, 4
    %v142 = vadd.f32 %v140, %v141
    %v143 = vrot.slane %v142, 2
    %v144 = vadd.f32 %v142, %v143
    %v145 = vrot.slane %v144, 1
    %v146 = vadd.f32 %v144, %v145
    %v147 = vmul.f32 %v140, %v140
    %v148 = vrot.slane %v147, 4
    %v149 = vadd.f32 %v147, %v148
    %v150 = vrot.slane %v149, 2
    %v151 = vadd.f32 %v149, %v150
    %v152 = vrot.slane %v151, 1
    %v153 = vadd.f32 %v151, %v152
    %v154 = vmul.f32 %v146, 0.125
    %v155 = vmul.f32 %v153, 0.125
    %v156 = vmul.f32 %v154, %v154
    %v157 = vsub.f32 %v155, %v156
    %v158 = vmax.f32 %v157, 0.0
    %v159 = vsub.f32 %v140, %v154
    %v160 = vadd.f32 %v158, 1e-05
    %v161 = vrsqrt.pop %v160
    %v162 = vmul.f32 %v159, %v161
    %v163 = vld [vmem:[%s2] sm:$0x1]
    %v164 = vlaneseq
    %v165 = vshrl.u32 %v164, 7
    %v166 = vsub.s32 0, %v165
    %v167 = vrot.slane %v163, %v166
    %v168 = vmul.f32 %v162, %v167
    %v169 = vld [vmem:[%s2 + $0x1] sm:$0x1]
    %v170 = vlaneseq
    %v171 = vshrl.u32 %v170, 7
    %v172 = vsub.s32 0, %v171
    %v173 = vrot.slane %v169, %v172
    %v174 = vadd.f32 %v168, %v173
    %vm175 = vcmp.gt.f32.partialorder %v174, 0.0
    %v176 = vmul.f32 %v174, 1.442695
    %v177 = vpow.pop %v176
    %v178 = vsub.f32 %v177, 1.0
    %v179 = vsel %vm175, %v174, %v178
    %v180 = vmul.f32 %v43, %v45
    %s181 = scalar_lea.vmem [#allocation5], 128
    %v182 = vld [vmem:[%s181] sm:$0xff]
    %v183 = vld [vmem:[%s181 + $0x8] sm:$0xff]
    %v184 = vld [vmem:[%s181 + $0x10] sm:$0xff]
    %v185 = vld [vmem:[%s181 + $0x18] sm:$0xff]
    %v186 = vld [vmem:[%s181 + $0x20] sm:$0xff]
    %v187 = vld [vmem:[%s181 + $0x28] sm:$0xff]
    %v188 = vld [vmem:[%s181 + $0x30] sm:$0xff]
    %v189 = vld [vmem:[%s181 + $0x38] sm:$0xff]
    %v190 = vld [vmem:[%s181 + $0x40] sm:$0xff]
    %v191 = vld [vmem:[%s181 + $0x48] sm:$0xff]
    %v192 = vld [vmem:[%s181 + $0x50] sm:$0xff]
    %v193 = vld [vmem:[%s181 + $0x58] sm:$0xff]
    %v194 = vld [vmem:[%s181 + $0x60] sm:$0xff]
    %v195 = vld [vmem:[%s181 + $0x68] sm:$0xff]
    %v196 = vld [vmem:[%s181 + $0x70] sm:$0xff]
    %v197 = vld [vmem:[%s181 + $0x78] sm:$0xff]
    %198 = vmatprep.subr.mxu0 0.0
    %199 = vmatpush1.msra.mxu0 %v182
    %200 = vmatprep.subr.mxu0 0.0
    %201 = vmatpush1.msra.mxu0 %v183
    %202 = vmatprep.subr.mxu0 0.0
    %203 = vmatpush1.msra.mxu0 %v184
    %204 = vmatprep.subr.mxu0 0.0
    %205 = vmatpush1.msra.mxu0 %v185
    %206 = vmatprep.subr.mxu0 0.0
    %207 = vmatpush1.msra.mxu0 %v186
    %208 = vmatprep.subr.mxu0 0.0
    %209 = vmatpush1.msra.mxu0 %v187
    %210 = vmatprep.subr.mxu0 0.0
    %211 = vmatpush1.msra.mxu0 %v188
    %212 = vmatprep.subr.mxu0 0.0
    %213 = vmatpush1.msra.mxu0 %v189
    %214 = vmatprep.subr.mxu0 0.0
    %215 = vmatpush1.msra.mxu0 %v190
    %216 = vmatprep.subr.mxu0 0.0
    %217 = vmatpush1.msra.mxu0 %v191
    %218 = vmatprep.subr.mxu0 0.0
    %219 = vmatpush1.msra.mxu0 %v192
    %220 = vmatprep.subr.mxu0 0.0
    %221 = vmatpush1.msra.mxu0 %v193
    %222 = vmatprep.subr.mxu0 0.0
    %223 = vmatpush1.msra.mxu0 %v194
    %224 = vmatprep.subr.mxu0 0.0
    %225 = vmatpush1.msra.mxu0 %v195
    %226 = vmatprep.subr.mxu0 0.0
    %227 = vmatpush1.msra.mxu0 %v196
    %228 = vmatprep.subr.mxu0 0.0
    %229 = vmatpush1.msra.mxu0 %v197
    %230 = vmatprep.subr.mxu0 0.0
    %231 = vmatpush1.msra.mxu0 0.0
    %232 = vmatprep.subr.mxu0 0.0
    %233 = vmatpush1.msra.mxu0 0.0
    %234 = vmatprep.subr.mxu0 0.0
    %235 = vmatpush1.msra.mxu0 0.0
    %236 = vmatprep.subr.mxu0 0.0
    %237 = vmatpush1.msra.mxu0 0.0
    %238 = vmatprep.subr.mxu0 0.0
    %239 = vmatpush1.msra.mxu0 0.0
    %240 = vmatprep.subr.mxu0 0.0
    %241 = vmatpush1.msra.mxu0 0.0
    %242 = vmatprep.subr.mxu0 0.0
    %243 = vmatpush1.msra.mxu0 0.0
    %244 = vmatprep.subr.mxu0 0.0
    %245 = vmatpush1.msra.mxu0 0.0
    %246 = vmatprep.subr.mxu0 0.0
    %247 = vmatpush1.msra.mxu0 0.0
    %248 = vmatprep.subr.mxu0 0.0
    %249 = vmatpush1.msra.mxu0 0.0
    %250 = vmatprep.subr.mxu0 0.0
    %251 = vmatpush1.msra.mxu0 0.0
    %252 = vmatprep.subr.mxu0 0.0
    %253 = vmatpush1.msra.mxu0 0.0
    %254 = vmatprep.subr.mxu0 0.0
    %255 = vmatpush1.msra.mxu0 0.0
    %256 = vmatprep.subr.mxu0 0.0
    %257 = vmatpush1.msra.mxu0 0.0
    %258 = vmatprep.subr.mxu0 0.0
    %259 = vmatpush1.msra.mxu0 0.0
    %260 = vmatprep.subr.mxu0 0.0
    %261 = vmatpush1.msra.mxu0 0.0
    %262 = vmatprep.mubr.f32.mxu0 0.0
    %263 = vmatmul.mubr.f32.gmra.mrb[0].mxu0 %v180
    %v264 = vpop.f32.mrb[0].mxu0
    %v265 = vadd.f32 0.0, %v264
    %v266 = vpop.f32.mrb[0].mxu0
    %267 = vdwg.mxu0
    %v268 = vlaneseq
    %v269 = vshrl.u32 %v268, 7
    %v270 = vsub.s32 0, %v269
    %v271 = vrot.slane %v265, %v270
    %v272 = vsub.f32 %v265, %v271
    %v273 = vrot.slane %v272, 4
    %v274 = vadd.f32 %v272, %v273
    %v275 = vrot.slane %v274, 2
    %v276 = vadd.f32 %v274, %v275
    %v277 = vrot.slane %v276, 1
    %v278 = vadd.f32 %v276, %v277
    %v279 = vmul.f32 %v272, %v272
    %v280 = vrot.slane %v279, 4
    %v281 = vadd.f32 %v279, %v280
    %v282 = vrot.slane %v281, 2
    %v283 = vadd.f32 %v281, %v282
    %v284 = vrot.slane %v283, 1
    %v285 = vadd.f32 %v283, %v284
    %v286 = vmul.f32 %v278, 0.125
    %v287 = vmul.f32 %v285, 0.125
    %v288 = vmul.f32 %v286, %v286
    %v289 = vsub.f32 %v287, %v288
    %v290 = vmax.f32 %v289, 0.0
    %v291 = vsub.f32 %v272, %v286
    %v292 = vadd.f32 %v290, 1e-10
    %v293 = vrsqrt.pop %v292
    %v294 = vmul.f32 %v291, %v293
    %v295 = vmax.f32 %v294, 0.0
    %s296 = scalar_lea.vmem [#allocation5], 256
    %v297 = vld [vmem:[%s296] sm:$0xff]
    %v298 = vld [vmem:[%s296 + $0x8] sm:$0xff]
    %v299 = vld [vmem:[%s296 + $0x10] sm:$0xff]
    %v300 = vld [vmem:[%s296 + $0x18] sm:$0xff]
    %v301 = vld [vmem:[%s296 + $0x20] sm:$0xff]
    %v302 = vld [vmem:[%s296 + $0x28] sm:$0xff]
    %v303 = vld [vmem:[%s296 + $0x30] sm:$0xff]
    %v304 = vld [vmem:[%s296 + $0x38] sm:$0xff]
    %v305 = vld [vmem:[%s296 + $0x40] sm:$0xff]
    %v306 = vld [vmem:[%s296 + $0x48] sm:$0xff]
    %v307 = vld [vmem:[%s296 + $0x50] sm:$0xff]
    %v308 = vld [vmem:[%s296 + $0x58] sm:$0xff]
    %v309 = vld [vmem:[%s296 + $0x60] sm:$0xff]
    %v310 = vld [vmem:[%s296 + $0x68] sm:$0xff]
    %v311 = vld [vmem:[%s296 + $0x70] sm:$0xff]
    %v312 = vld [vmem:[%s296 + $0x78] sm:$0xff]
    %313 = vmatprep.subr.mxu0 0.0
    %314 = vmatpush1.msra.mxu0 %v297
    %315 = vmatprep.subr.mxu0 0.0
    %316 = vmatpush1.msra.mxu0 %v298
    %317 = vmatprep.subr.mxu0 0.0
    %318 = vmatpush1.msra.mxu0 %v299
    %319 = vmatprep.subr.mxu0 0.0
    %320 = vmatpush1.msra.mxu0 %v300
    %321 = vmatprep.subr.mxu0 0.0
    %322 = vmatpush1.msra.mxu0 %v301
    %323 = vmatprep.subr.mxu0 0.0
    %324 = vmatpush1.msra.mxu0 %v302
    %325 = vmatprep.subr.mxu0 0.0
    %326 = vmatpush1.msra.mxu0 %v303
    %327 = vmatprep.subr.mxu0 0.0
    %328 = vmatpush1.msra.mxu0 %v304
    %329 = vmatprep.subr.mxu0 0.0
    %330 = vmatpush1.msra.mxu0 %v305
    %331 = vmatprep.subr.mxu0 0.0
    %332 = vmatpush1.msra.mxu0 %v306
    %333 = vmatprep.subr.mxu0 0.0
    %334 = vmatpush1.msra.mxu0 %v307
    %335 = vmatprep.subr.mxu0 0.0
    %336 = vmatpush1.msra.mxu0 %v308
    %337 = vmatprep.subr.mxu0 0.0
    %338 = vmatpush1.msra.mxu0 %v309
    %339 = vmatprep.subr.mxu0 0.0
    %340 = vmatpush1.msra.mxu0 %v310
    %341 = vmatprep.subr.mxu0 0.0
    %342 = vmatpush1.msra.mxu0 %v311
    %343 = vmatprep.subr.mxu0 0.0
    %344 = vmatpush1.msra.mxu0 %v312
    %345 = vmatprep.subr.mxu0 0.0
    %346 = vmatpush1.msra.mxu0 0.0
    %347 = vmatprep.subr.mxu0 0.0
    %348 = vmatpush1.msra.mxu0 0.0
    %349 = vmatprep.subr.mxu0 0.0
    %350 = vmatpush1.msra.mxu0 0.0
    %351 = vmatprep.subr.mxu0 0.0
    %352 = vmatpush1.msra.mxu0 0.0
    %353 = vmatprep.subr.mxu0 0.0
    %354 = vmatpush1.msra.mxu0 0.0
    %355 = vmatprep.subr.mxu0 0.0
    %356 = vmatpush1.msra.mxu0 0.0
    %357 = vmatprep.subr.mxu0 0.0
    %358 = vmatpush1.msra.mxu0 0.0
    %359 = vmatprep.subr.mxu0 0.0
    %360 = vmatpush1.msra.mxu0 0.0
    %361 = vmatprep.subr.mxu0 0.0
    %362 = vmatpush1.msra.mxu0 0.0
    %363 = vmatprep.subr.mxu0 0.0
    %364 = vmatpush1.msra.mxu0 0.0
    %365 = vmatprep.subr.mxu0 0.0
    %366 = vmatpush1.msra.mxu0 0.0
    %367 = vmatprep.subr.mxu0 0.0
    %368 = vmatpush1.msra.mxu0 0.0
    %369 = vmatprep.subr.mxu0 0.0
    %370 = vmatpush1.msra.mxu0 0.0
    %371 = vmatprep.subr.mxu0 0.0
    %372 = vmatpush1.msra.mxu0 0.0
    %373 = vmatprep.subr.mxu0 0.0
    %374 = vmatpush1.msra.mxu0 0.0
    %375 = vmatprep.subr.mxu0 0.0
    %376 = vmatpush1.msra.mxu0 0.0
    %377 = vmatprep.mubr.f32.mxu0 0.0
    %378 = vmatmul.mubr.f32.gmra.mrb[0].mxu0 %v295
    %v379 = vpop.f32.mrb[0].mxu0
    %v380 = vadd.f32 0.0, %v379
    %v381 = vpop.f32.mrb[0].mxu0
    %382 = vdwg.mxu0
    %v383 = vlaneseq
    %v384 = vshrl.u32 %v383, 7
    %v385 = vsub.s32 0, %v384
    %v386 = vrot.slane %v380, %v385
    %v387 = vsub.f32 %v380, %v386
    %v388 = vrot.slane %v387, 4
    %v389 = vadd.f32 %v387, %v388
    %v390 = vrot.slane %v389, 2
    %v391 = vadd.f32 %v389, %v390
    %v392 = vrot.slane %v391, 1
    %v393 = vadd.f32 %v391, %v392
    %v394 = vmul.f32 %v387, %v387
    %v395 = vrot.slane %v394, 4
    %v396 = vadd.f32 %v394, %v395
    %v397 = vrot.slane %v396, 2
    %v398 = vadd.f32 %v396, %v397
    %v399 = vrot.slane %v398, 1
    %v400 = vadd.f32 %v398, %v399
    %v401 = vmul.f32 %v393, 0.125
    %v402 = vmul.f32 %v400, 0.125
    %v403 = vmul.f32 %v401, %v401
    %v404 = vsub.f32 %v402, %v403
    %v405 = vmax.f32 %v404, 0.0
    %v406 = vsub.f32 %v387, %v401
    %v407 = vadd.f32 %v405, 1e-10
    %v408 = vrsqrt.pop %v407
    %v409 = vmul.f32 %v406, %v408
    %v410 = vmax.f32 %v409, 0.0
    %s411 = scalar_lea.vmem [#allocation5], 384
    %v412 = vld [vmem:[%s411] sm:$0xff]
    %v413 = vld [vmem:[%s411 + $0x8] sm:$0xff]
    %v414 = vld [vmem:[%s411 + $0x10] sm:$0xff]
    %v415 = vld [vmem:[%s411 + $0x18] sm:$0xff]
    %v416 = vld [vmem:[%s411 + $0x20] sm:$0xff]
    %v417 = vld [vmem:[%s411 + $0x28] sm:$0xff]
    %v418 = vld [vmem:[%s411 + $0x30] sm:$0xff]
    %v419 = vld [vmem:[%s411 + $0x38] sm:$0xff]
    %v420 = vld [vmem:[%s411 + $0x40] sm:$0xff]
    %v421 = vld [vmem:[%s411 + $0x48] sm:$0xff]
    %v422 = vld [vmem:[%s411 + $0x50] sm:$0xff]
    %v423 = vld [vmem:[%s411 + $0x58] sm:$0xff]
    %v424 = vld [vmem:[%s411 + $0x60] sm:$0xff]
    %v425 = vld [vmem:[%s411 + $0x68] sm:$0xff]
    %v426 = vld [vmem:[%s411 + $0x70] sm:$0xff]
    %v427 = vld [vmem:[%s411 + $0x78] sm:$0xff]
    %428 = vmatprep.subr.mxu0 0.0
    %429 = vmatpush1.msra.mxu0 %v412
    %430 = vmatprep.subr.mxu0 0.0
    %431 = vmatpush1.msra.mxu0 %v413
    %432 = vmatprep.subr.mxu0 0.0
    %433 = vmatpush1.msra.mxu0 %v414
    %434 = vmatprep.subr.mxu0 0.0
    %435 = vmatpush1.msra.mxu0 %v415
    %436 = vmatprep.subr.mxu0 0.0
    %437 = vmatpush1.msra.mxu0 %v416
    %438 = vmatprep.subr.mxu0 0.0
    %439 = vmatpush1.msra.mxu0 %v417
    %440 = vmatprep.subr.mxu0 0.0
    %441 = vmatpush1.msra.mxu0 %v418
    %442 = vmatprep.subr.mxu0 0.0
    %443 = vmatpush1.msra.mxu0 %v419
    %444 = vmatprep.subr.mxu0 0.0
    %445 = vmatpush1.msra.mxu0 %v420
    %446 = vmatprep.subr.mxu0 0.0
    %447 = vmatpush1.msra.mxu0 %v421
    %448 = vmatprep.subr.mxu0 0.0
    %449 = vmatpush1.msra.mxu0 %v422
    %450 = vmatprep.subr.mxu0 0.0
    %451 = vmatpush1.msra.mxu0 %v423
    %452 = vmatprep.subr.mxu0 0.0
    %453 = vmatpush1.msra.mxu0 %v424
    %454 = vmatprep.subr.mxu0 0.0
    %455 = vmatpush1.msra.mxu0 %v425
    %456 = vmatprep.subr.mxu0 0.0
    %457 = vmatpush1.msra.mxu0 %v426
    %458 = vmatprep.subr.mxu0 0.0
    %459 = vmatpush1.msra.mxu0 %v427
    %460 = vmatprep.subr.mxu0 0.0
    %461 = vmatpush1.msra.mxu0 0.0
    %462 = vmatprep.subr.mxu0 0.0
    %463 = vmatpush1.msra.mxu0 0.0
    %464 = vmatprep.subr.mxu0 0.0
    %465 = vmatpush1.msra.mxu0 0.0
    %466 = vmatprep.subr.mxu0 0.0
    %467 = vmatpush1.msra.mxu0 0.0
    %468 = vmatprep.subr.mxu0 0.0
    %469 = vmatpush1.msra.mxu0 0.0
    %470 = vmatprep.subr.mxu0 0.0
    %471 = vmatpush1.msra.mxu0 0.0
    %472 = vmatprep.subr.mxu0 0.0
    %473 = vmatpush1.msra.mxu0 0.0
    %474 = vmatprep.subr.mxu0 0.0
    %475 = vmatpush1.msra.mxu0 0.0
    %476 = vmatprep.subr.mxu0 0.0
    %477 = vmatpush1.msra.mxu0 0.0
    %478 = vmatprep.subr.mxu0 0.0
    %479 = vmatpush1.msra.mxu0 0.0
    %480 = vmatprep.subr.mxu0 0.0
    %481 = vmatpush1.msra.mxu0 0.0
    %482 = vmatprep.subr.mxu0 0.0
    %483 = vmatpush1.msra.mxu0 0.0
    %484 = vmatprep.subr.mxu0 0.0
    %485 = vmatpush1.msra.mxu0 0.0
    %486 = vmatprep.subr.mxu0 0.0
    %487 = vmatpush1.msra.mxu0 0.0
    %488 = vmatprep.subr.mxu0 0.0
    %489 = vmatpush1.msra.mxu0 0.0
    %490 = vmatprep.subr.mxu0 0.0
    %491 = vmatpush1.msra.mxu0 0.0
    %492 = vmatprep.mubr.f32.mxu0 0.0
    %493 = vmatmul.mubr.f32.gmra.mrb[0].mxu0 %v410
    %v494 = vpop.f32.mrb[0].mxu0
    %v495 = vadd.f32 0.0, %v494
    %v496 = vpop.f32.mrb[0].mxu0
    %497 = vdwg.mxu0
    %v498 = vlaneseq
    %v499 = vshrl.u32 %v498, 7
    %v500 = vsub.s32 0, %v499
    %v501 = vrot.slane %v495, %v500
    %v502 = vsub.f32 %v495, %v501
    %v503 = vrot.slane %v502, 4
    %v504 = vadd.f32 %v502, %v503
    %v505 = vrot.slane %v504, 2
    %v506 = vadd.f32 %v504, %v505
    %v507 = vrot.slane %v506, 1
    %v508 = vadd.f32 %v506, %v507
    %v509 = vmul.f32 %v502, %v502
    %v510 = vrot.slane %v509, 4
    %v511 = vadd.f32 %v509, %v510
    %v512 = vrot.slane %v511, 2
    %v513 = vadd.f32 %v511, %v512
    %v514 = vrot.slane %v513, 1
    %v515 = vadd.f32 %v513, %v514
    %v516 = vmul.f32 %v508, 0.125
    %v517 = vmul.f32 %v515, 0.125
    %v518 = vmul.f32 %v516, %v516
    %v519 = vsub.f32 %v517, %v518
    %v520 = vmax.f32 %v519, 0.0
    %v521 = vsub.f32 %v502, %v516
    %v522 = vadd.f32 %v520, 1e-10
    %v523 = vrsqrt.pop %v522
    %v524 = vmul.f32 %v521, %v523
    %v525 = vmax.f32 %v524, 0.0
    %s526 = scalar_lea.vmem [#allocation5], 512
    %v527 = vld [vmem:[%s526] sm:$0xff]
    %v528 = vld [vmem:[%s526 + $0x8] sm:$0xff]
    %v529 = vld [vmem:[%s526 + $0x10] sm:$0xff]
    %v530 = vld [vmem:[%s526 + $0x18] sm:$0xff]
    %v531 = vld [vmem:[%s526 + $0x20] sm:$0xff]
    %v532 = vld [vmem:[%s526 + $0x28] sm:$0xff]
    %v533 = vld [vmem:[%s526 + $0x30] sm:$0xff]
    %v534 = vld [vmem:[%s526 + $0x38] sm:$0xff]
    %v535 = vld [vmem:[%s526 + $0x40] sm:$0xff]
    %v536 = vld [vmem:[%s526 + $0x48] sm:$0xff]
    %v537 = vld [vmem:[%s526 + $0x50] sm:$0xff]
    %v538 = vld [vmem:[%s526 + $0x58] sm:$0xff]
    %v539 = vld [vmem:[%s526 + $0x60] sm:$0xff]
    %v540 = vld [vmem:[%s526 + $0x68] sm:$0xff]
    %v541 = vld [vmem:[%s526 + $0x70] sm:$0xff]
    %v542 = vld [vmem:[%s526 + $0x78] sm:$0xff]
    %543 = vmatprep.subr.mxu0 0.0
    %544 = vmatpush1.msra.mxu0 %v527
    %545 = vmatprep.subr.mxu0 0.0
    %546 = vmatpush1.msra.mxu0 %v528
    %547 = vmatprep.subr.mxu0 0.0
    %548 = vmatpush1.msra.mxu0 %v529
    %549 = vmatprep.subr.mxu0 0.0
    %550 = vmatpush1.msra.mxu0 %v530
    %551 = vmatprep.subr.mxu0 0.0
    %552 = vmatpush1.msra.mxu0 %v531
    %553 = vmatprep.subr.mxu0 0.0
    %554 = vmatpush1.msra.mxu0 %v532
    %555 = vmatprep.subr.mxu0 0.0
    %556 = vmatpush1.msra.mxu0 %v533
    %557 = vmatprep.subr.mxu0 0.0
    %558 = vmatpush1.msra.mxu0 %v534
    %559 = vmatprep.subr.mxu0 0.0
    %560 = vmatpush1.msra.mxu0 %v535
    %561 = vmatprep.subr.mxu0 0.0
    %562 = vmatpush1.msra.mxu0 %v536
    %563 = vmatprep.subr.mxu0 0.0
    %564 = vmatpush1.msra.mxu0 %v537
    %565 = vmatprep.subr.mxu0 0.0
    %566 = vmatpush1.msra.mxu0 %v538
    %567 = vmatprep.subr.mxu0 0.0
    %568 = vmatpush1.msra.mxu0 %v539
    %569 = vmatprep.subr.mxu0 0.0
    %570 = vmatpush1.msra.mxu0 %v540
    %571 = vmatprep.subr.mxu0 0.0
    %572 = vmatpush1.msra.mxu0 %v541
    %573 = vmatprep.subr.mxu0 0.0
    %574 = vmatpush1.msra.mxu0 %v542
    %575 = vmatprep.subr.mxu0 0.0
    %576 = vmatpush1.msra.mxu0 0.0
    %577 = vmatprep.subr.mxu0 0.0
    %578 = vmatpush1.msra.mxu0 0.0
    %579 = vmatprep.subr.mxu0 0.0
    %580 = vmatpush1.msra.mxu0 0.0
    %581 = vmatprep.subr.mxu0 0.0
    %582 = vmatpush1.msra.mxu0 0.0
    %583 = vmatprep.subr.mxu0 0.0
    %584 = vmatpush1.msra.mxu0 0.0
    %585 = vmatprep.subr.mxu0 0.0
    %586 = vmatpush1.msra.mxu0 0.0
    %587 = vmatprep.subr.mxu0 0.0
    %588 = vmatpush1.msra.mxu0 0.0
    %589 = vmatprep.subr.mxu0 0.0
    %590 = vmatpush1.msra.mxu0 0.0
    %591 = vmatprep.subr.mxu0 0.0
    %592 = vmatpush1.msra.mxu0 0.0
    %593 = vmatprep.subr.mxu0 0.0
    %594 = vmatpush1.msra.mxu0 0.0
    %595 = vmatprep.subr.mxu0 0.0
    %596 = vmatpush1.msra.mxu0 0.0
    %597 = vmatprep.subr.mxu0 0.0
    %598 = vmatpush1.msra.mxu0 0.0
    %599 = vmatprep.subr.mxu0 0.0
    %600 = vmatpush1.msra.mxu0 0.0
    %601 = vmatprep.subr.mxu0 0.0
    %602 = vmatpush1.msra.mxu0 0.0
    %603 = vmatprep.subr.mxu0 0.0
    %604 = vmatpush1.msra.mxu0 0.0
    %605 = vmatprep.subr.mxu0 0.0
    %606 = vmatpush1.msra.mxu0 0.0
    %607 = vmatprep.mubr.f32.mxu0 0.0
    %608 = vmatmul.mubr.f32.gmra.mrb[0].mxu0 %v525
    %v609 = vpop.f32.mrb[0].mxu0
    %v610 = vadd.f32 0.0, %v609
    %v611 = vpop.f32.mrb[0].mxu0
    %612 = vdwg.mxu0
    %v613 = vlaneseq
    %v614 = vshrl.u32 %v613, 7
    %v615 = vsub.s32 0, %v614
    %v616 = vrot.slane %v610, %v615
    %v617 = vsub.f32 %v610, %v616
    %v618 = vrot.slane %v617, 4
    %v619 = vadd.f32 %v617, %v618
    %v620 = vrot.slane %v619, 2
    %v621 = vadd.f32 %v619, %v620
    %v622 = vrot.slane %v621, 1
    %v623 = vadd.f32 %v621, %v622
    %v624 = vmul.f32 %v617, %v617
    %v625 = vrot.slane %v624, 4
    %v626 = vadd.f32 %v624, %v625
    %v627 = vrot.slane %v626, 2
    %v628 = vadd.f32 %v626, %v627
    %v629 = vrot.slane %v628, 1
    %v630 = vadd.f32 %v628, %v629
    %v631 = vmul.f32 %v623, 0.125
    %v632 = vmul.f32 %v630, 0.125
    %v633 = vmul.f32 %v631, %v631
    %v634 = vsub.f32 %v632, %v633
    %v635 = vmax.f32 %v634, 0.0
    %v636 = vsub.f32 %v617, %v631
    %v637 = vadd.f32 %v635, 1e-10
    %v638 = vrsqrt.pop %v637
    %v639 = vmul.f32 %v636, %v638
    %v640 = vmax.f32 %v639, 0.0
    %s641 = scalar_lea.vmem [#allocation5], 640
    %v642 = vld [vmem:[%s641] sm:$0xff]
    %v643 = vld [vmem:[%s641 + $0x8] sm:$0xff]
    %v644 = vld [vmem:[%s641 + $0x10] sm:$0xff]
    %v645 = vld [vmem:[%s641 + $0x18] sm:$0xff]
    %v646 = vld [vmem:[%s641 + $0x20] sm:$0xff]
    %v647 = vld [vmem:[%s641 + $0x28] sm:$0xff]
    %v648 = vld [vmem:[%s641 + $0x30] sm:$0xff]
    %v649 = vld [vmem:[%s641 + $0x38] sm:$0xff]
    %v650 = vld [vmem:[%s641 + $0x40] sm:$0xff]
    %v651 = vld [vmem:[%s641 + $0x48] sm:$0xff]
    %v652 = vld [vmem:[%s641 + $0x50] sm:$0xff]
    %v653 = vld [vmem:[%s641 + $0x58] sm:$0xff]
    %v654 = vld [vmem:[%s641 + $0x60] sm:$0xff]
    %v655 = vld [vmem:[%s641 + $0x68] sm:$0xff]
    %v656 = vld [vmem:[%s641 + $0x70] sm:$0xff]
    %v657 = vld [vmem:[%s641 + $0x78] sm:$0xff]
    %s658 = scalar_lea.vmem [#allocation5], 768
    %v659 = vld [vmem:[%s658] sm:$0xff]
    %v660 = vld [vmem:[%s658 + $0x8] sm:$0xff]
    %v661 = vld [vmem:[%s658 + $0x10] sm:$0xff]
    %v662 = vld [vmem:[%s658 + $0x18] sm:$0xff]
    %v663 = vld [vmem:[%s658 + $0x20] sm:$0xff]
    %v664 = vld [vmem:[%s658 + $0x28] sm:$0xff]
    %v665 = vld [vmem:[%s658 + $0x30] sm:$0xff]
    %v666 = vld [vmem:[%s658 + $0x38] sm:$0xff]
    %v667 = vld [vmem:[%s658 + $0x40] sm:$0xff]
    %v668 = vld [vmem:[%s658 + $0x48] sm:$0xff]
    %v669 = vld [vmem:[%s658 + $0x50] sm:$0xff]
    %v670 = vld [vmem:[%s658 + $0x58] sm:$0xff]
    %v671 = vld [vmem:[%s658 + $0x60] sm:$0xff]
    %v672 = vld [vmem:[%s658 + $0x68] sm:$0xff]
    %v673 = vld [vmem:[%s658 + $0x70] sm:$0xff]
    %v674 = vld [vmem:[%s658 + $0x78] sm:$0xff]
    %675 = vmatprep.subr.mxu0 0.0
    %676 = vmatpush1.msra.mxu0 %v659
    %677 = vmatprep.subr.mxu0 0.0
    %678 = vmatpush1.msra.mxu0 %v660
    %679 = vmatprep.subr.mxu0 0.0
    %680 = vmatpush1.msra.mxu0 %v661
    %681 = vmatprep.subr.mxu0 0.0
    %682 = vmatpush1.msra.mxu0 %v662
    %683 = vmatprep.subr.mxu0 0.0
    %684 = vmatpush1.msra.mxu0 %v663
    %685 = vmatprep.subr.mxu0 0.0
    %686 = vmatpush1.msra.mxu0 %v664
    %687 = vmatprep.subr.mxu0 0.0
    %688 = vmatpush1.msra.mxu0 %v665
    %689 = vmatprep.subr.mxu0 0.0
    %690 = vmatpush1.msra.mxu0 %v666
    %691 = vmatprep.subr.mxu0 0.0
    %692 = vmatpush1.msra.mxu0 %v667
    %693 = vmatprep.subr.mxu0 0.0
    %694 = vmatpush1.msra.mxu0 %v668
    %695 = vmatprep.subr.mxu0 0.0
    %696 = vmatpush1.msra.mxu0 %v669
    %697 = vmatprep.subr.mxu0 0.0
    %698 = vmatpush1.msra.mxu0 %v670
    %699 = vmatprep.subr.mxu0 0.0
    %700 = vmatpush1.msra.mxu0 %v671
    %701 = vmatprep.subr.mxu0 0.0
    %702 = vmatpush1.msra.mxu0 %v672
    %703 = vmatprep.subr.mxu0 0.0
    %704 = vmatpush1.msra.mxu0 %v673
    %705 = vmatprep.subr.mxu0 0.0
    %706 = vmatpush1.msra.mxu0 %v674
    %707 = vmatprep.subr.mxu0 0.0
    %708 = vmatpush1.msra.mxu0 0.0
    %709 = vmatprep.subr.mxu0 0.0
    %710 = vmatpush1.msra.mxu0 0.0
    %711 = vmatprep.subr.mxu0 0.0
    %712 = vmatpush1.msra.mxu0 0.0
    %713 = vmatprep.subr.mxu0 0.0
    %714 = vmatpush1.msra.mxu0 0.0
    %715 = vmatprep.subr.mxu0 0.0
    %716 = vmatpush1.msra.mxu0 0.0
    %717 = vmatprep.subr.mxu0 0.0
    %718 = vmatpush1.msra.mxu0 0.0
    %719 = vmatprep.subr.mxu0 0.0
    %720 = vmatpush1.msra.mxu0 0.0
    %721 = vmatprep.subr.mxu0 0.0
    %722 = vmatpush1.msra.mxu0 0.0
    %723 = vmatprep.subr.mxu0 0.0
    %724 = vmatpush1.msra.mxu0 0.0
    %725 = vmatprep.subr.mxu0 0.0
    %726 = vmatpush1.msra.mxu0 0.0
    %727 = vmatprep.subr.mxu0 0.0
    %728 = vmatpush1.msra.mxu0 0.0
    %729 = vmatprep.subr.mxu0 0.0
    %730 = vmatpush1.msra.mxu0 0.0
    %731 = vmatprep.subr.mxu0 0.0
    %732 = vmatpush1.msra.mxu0 0.0
    %733 = vmatprep.subr.mxu0 0.0
    %734 = vmatpush1.msra.mxu0 0.0
    %735 = vmatprep.subr.mxu0 0.0
    %736 = vmatpush1.msra.mxu0 0.0
    %737 = vmatprep.subr.mxu0 0.0
    %738 = vmatpush1.msra.mxu0 0.0
    %739 = vmatprep.mubr.f32.mxu0 0.0
    %740 = vmatmul.mubr.f32.gmra.mrb[0].mxu0 %v179
    %v741 = vpop.f32.mrb[0].mxu0
    %v742 = vadd.f32 0.0, %v741
    %v743 = vpop.f32.mrb[0].mxu0
    %744 = vdwg.mxu0
    %745 = vmatprep.subr.mxu0 0.0
    %746 = vmatpush1.msra.mxu0 %v642
    %747 = vmatprep.subr.mxu0 0.0
    %748 = vmatpush1.msra.mxu0 %v643
    %749 = vmatprep.subr.mxu0 0.0
    %750 = vmatpush1.msra.mxu0 %v644
    %751 = vmatprep.subr.mxu0 0.0
    %752 = vmatpush1.msra.mxu0 %v645
    %753 = vmatprep.subr.mxu0 0.0
    %754 = vmatpush1.msra.mxu0 %v646
    %755 = vmatprep.subr.mxu0 0.0
    %756 = vmatpush1.msra.mxu0 %v647
    %757 = vmatprep.subr.mxu0 0.0
    %758 = vmatpush1.msra.mxu0 %v648
    %759 = vmatprep.subr.mxu0 0.0
    %760 = vmatpush1.msra.mxu0 %v649
    %761 = vmatprep.subr.mxu0 0.0
    %762 = vmatpush1.msra.mxu0 %v650
    %763 = vmatprep.subr.mxu0 0.0
    %764 = vmatpush1.msra.mxu0 %v651
    %765 = vmatprep.subr.mxu0 0.0
    %766 = vmatpush1.msra.mxu0 %v652
    %767 = vmatprep.subr.mxu0 0.0
    %768 = vmatpush1.msra.mxu0 %v653
    %769 = vmatprep.subr.mxu0 0.0
    %770 = vmatpush1.msra.mxu0 %v654
    %771 = vmatprep.subr.mxu0 0.0
    %772 = vmatpush1.msra.mxu0 %v655
    %773 = vmatprep.subr.mxu0 0.0
    %774 = vmatpush1.msra.mxu0 %v656
    %775 = vmatprep.subr.mxu0 0.0
    %776 = vmatpush1.msra.mxu0 %v657
    %777 = vmatprep.subr.mxu0 0.0
    %778 = vmatpush1.msra.mxu0 0.0
    %779 = vmatprep.subr.mxu0 0.0
    %780 = vmatpush1.msra.mxu0 0.0
    %781 = vmatprep.subr.mxu0 0.0
    %782 = vmatpush1.msra.mxu0 0.0
    %783 = vmatprep.subr.mxu0 0.0
    %784 = vmatpush1.msra.mxu0 0.0
    %785 = vmatprep.subr.mxu0 0.0
    %786 = vmatpush1.msra.mxu0 0.0
    %787 = vmatprep.subr.mxu0 0.0
    %788 = vmatpush1.msra.mxu0 0.0
    %789 = vmatprep.subr.mxu0 0.0
    %790 = vmatpush1.msra.mxu0 0.0
    %791 = vmatprep.subr.mxu0 0.0
    %792 = vmatpush1.msra.mxu0 0.0
    %793 = vmatprep.subr.mxu0 0.0
    %794 = vmatpush1.msra.mxu0 0.0
    %795 = vmatprep.subr.mxu0 0.0
    %796 = vmatpush1.msra.mxu0 0.0
    %797 = vmatprep.subr.mxu0 0.0
    %798 = vmatpush1.msra.mxu0 0.0
    %799 = vmatprep.subr.mxu0 0.0
    %800 = vmatpush1.msra.mxu0 0.0
    %801 = vmatprep.subr.mxu0 0.0
    %802 = vmatpush1.msra.mxu0 0.0
    %803 = vmatprep.subr.mxu0 0.0
    %804 = vmatpush1.msra.mxu0 0.0
    %805 = vmatprep.subr.mxu0 0.0
    %806 = vmatpush1.msra.mxu0 0.0
    %807 = vmatprep.subr.mxu0 0.0
    %808 = vmatpush1.msra.mxu0 0.0
    %809 = vmatprep.mubr.f32.mxu0 0.0
    %810 = vmatmul.mubr.f32.gmra.mrb[0].mxu0 %v640
    %v811 = vpop.f32.mrb[0].mxu0
    %v812 = vadd.f32 %v742, %v811
    %v813 = vpop.f32.mrb[0].mxu0
    %814 = vdwg.mxu0
    %v815 = vlaneseq
    %v816 = vshrl.u32 %v815, 7
    %v817 = vsub.s32 0, %v816
    %v818 = vrot.slane %v812, %v817
    %v819 = vsub.f32 %v812, %v818
    %v820 = vrot.slane %v819, 4
    %v821 = vadd.f32 %v819, %v820
    %v822 = vrot.slane %v821, 2
    %v823 = vadd.f32 %v821, %v822
    %v824 = vrot.slane %v823, 1
    %v825 = vadd.f32 %v823, %v824
    %v826 = vmul.f32 %v819, %v819
    %v827 = vrot.slane %v826, 4
    %v828 = vadd.f32 %v826, %v827
    %v829 = vrot.slane %v828, 2
    %v830 = vadd.f32 %v828, %v829
    %v831 = vrot.slane %v830, 1
    %v832 = vadd.f32 %v830, %v831
    %v833 = vmul.f32 %v825, 0.125
    %v834 = vmul.f32 %v832, 0.125
    %v835 = vmul.f32 %v833, %v833
    %v836 = vsub.f32 %v834, %v835
    %v837 = vmax.f32 %v836, 0.0
    %v838 = vsub.f32 %v819, %v833
    %v839 = vadd.f32 %v837, 1e-10
    %v840 = vrsqrt.pop %v839
    %v841 = vmul.f32 %v838, %v840
    %v842 = vmax.f32 %v841, 0.0
    %s843 = scalar_lea.vmem [#allocation5], 1024
    %v844 = vld [vmem:[%s843] sm:$0xff]
    %v845 = vld [vmem:[%s843 + $0x8] sm:$0xff]
    %v846 = vld [vmem:[%s843 + $0x10] sm:$0xff]
    %v847 = vld [vmem:[%s843 + $0x18] sm:$0xff]
    %v848 = vld [vmem:[%s843 + $0x20] sm:$0xff]
    %v849 = vld [vmem:[%s843 + $0x28] sm:$0xff]
    %v850 = vld [vmem:[%s843 + $0x30] sm:$0xff]
    %v851 = vld [vmem:[%s843 + $0x38] sm:$0xff]
    %v852 = vld [vmem:[%s843 + $0x40] sm:$0xff]
    %v853 = vld [vmem:[%s843 + $0x48] sm:$0xff]
    %v854 = vld [vmem:[%s843 + $0x50] sm:$0xff]
    %v855 = vld [vmem:[%s843 + $0x58] sm:$0xff]
    %v856 = vld [vmem:[%s843 + $0x60] sm:$0xff]
    %v857 = vld [vmem:[%s843 + $0x68] sm:$0xff]
    %v858 = vld [vmem:[%s843 + $0x70] sm:$0xff]
    %v859 = vld [vmem:[%s843 + $0x78] sm:$0xff]
    %860 = vmatprep.subr.mxu0 0.0
    %861 = vmatpush1.msra.mxu0 %v844
    %862 = vmatprep.subr.mxu0 0.0
    %863 = vmatpush1.msra.mxu0 %v845
    %864 = vmatprep.subr.mxu0 0.0
    %865 = vmatpush1.msra.mxu0 %v846
    %866 = vmatprep.subr.mxu0 0.0
    %867 = vmatpush1.msra.mxu0 %v847
    %868 = vmatprep.subr.mxu0 0.0
    %869 = vmatpush1.msra.mxu0 %v848
    %870 = vmatprep.subr.mxu0 0.0
    %871 = vmatpush1.msra.mxu0 %v849
    %872 = vmatprep.subr.mxu0 0.0
    %873 = vmatpush1.msra.mxu0 %v850
    %874 = vmatprep.subr.mxu0 0.0
    %875 = vmatpush1.msra.mxu0 %v851
    %876 = vmatprep.subr.mxu0 0.0
    %877 = vmatpush1.msra.mxu0 %v852
    %878 = vmatprep.subr.mxu0 0.0
    %879 = vmatpush1.msra.mxu0 %v853
    %880 = vmatprep.subr.mxu0 0.0
    %881 = vmatpush1.msra.mxu0 %v854
    %882 = vmatprep.subr.mxu0 0.0
    %883 = vmatpush1.msra.mxu0 %v855
    %884 = vmatprep.subr.mxu0 0.0
    %885 = vmatpush1.msra.mxu0 %v856
    %886 = vmatprep.subr.mxu0 0.0
    %887 = vmatpush1.msra.mxu0 %v857
    %888 = vmatprep.subr.mxu0 0.0
    %889 = vmatpush1.msra.mxu0 %v858
    %890 = vmatprep.subr.mxu0 0.0
    %891 = vmatpush1.msra.mxu0 %v859
    %892 = vmatprep.subr.mxu0 0.0
    %893 = vmatpush1.msra.mxu0 0.0
    %894 = vmatprep.subr.mxu0 0.0
    %895 = vmatpush1.msra.mxu0 0.0
    %896 = vmatprep.subr.mxu0 0.0
    %897 = vmatpush1.msra.mxu0 0.0
    %898 = vmatprep.subr.mxu0 0.0
    %899 = vmatpush1.msra.mxu0 0.0
    %900 = vmatprep.subr.mxu0 0.0
    %901 = vmatpush1.msra.mxu0 0.0
    %902 = vmatprep.subr.mxu0 0.0
    %903 = vmatpush1.msra.mxu0 0.0
    %904 = vmatprep.subr.mxu0 0.0
    %905 = vmatpush1.msra.mxu0 0.0
    %906 = vmatprep.subr.mxu0 0.0
    %907 = vmatpush1.msra.mxu0 0.0
    %908 = vmatprep.subr.mxu0 0.0
    %909 = vmatpush1.msra.mxu0 0.0
    %910 = vmatprep.subr.mxu0 0.0
    %911 = vmatpush1.msra.mxu0 0.0
    %912 = vmatprep.subr.mxu0 0.0
    %913 = vmatpush1.msra.mxu0 0.0
    %914 = vmatprep.subr.mxu0 0.0
    %915 = vmatpush1.msra.mxu0 0.0
    %916 = vmatprep.subr.mxu0 0.0
    %917 = vmatpush1.msra.mxu0 0.0
    %918 = vmatprep.subr.mxu0 0.0
    %919 = vmatpush1.msra.mxu0 0.0
    %920 = vmatprep.subr.mxu0 0.0
    %921 = vmatpush1.msra.mxu0 0.0
    %922 = vmatprep.subr.mxu0 0.0
    %923 = vmatpush1.msra.mxu0 0.0
    %924 = vmatprep.mubr.f32.mxu0 0.0
    %925 = vmatmul.mubr.f32.gmra.mrb[0].mxu0 %v842
    %v926 = vpop.f32.mrb[0].mxu0
    %v927 = vadd.f32 0.0, %v926
    %v928 = vpop.f32.mrb[0].mxu0
    %929 = vdwg.mxu0
    %v930 = vlaneseq
    %v931 = vshrl.u32 %v930, 7
    %v932 = vsub.s32 0, %v931
    %v933 = vrot.slane %v927, %v932
    %v934 = vsub.f32 %v927, %v933
    %v935 = vrot.slane %v934, 4
    %v936 = vadd.f32 %v934, %v935
    %v937 = vrot.slane %v936, 2
    %v938 = vadd.f32 %v936, %v937
    %v939 = vrot.slane %v938, 1
    %v940 = vadd.f32 %v938, %v939
    %v941 = vmul.f32 %v934, %v934
    %v942 = vrot.slane %v941, 4
    %v943 = vadd.f32 %v941, %v942
    %v944 = vrot.slane %v943, 2
    %v945 = vadd.f32 %v943, %v944
    %v946 = vrot.slane %v945, 1
    %v947 = vadd.f32 %v945, %v946
    %v948 = vmul.f32 %v940, 0.125
    %v949 = vmul.f32 %v947, 0.125
    %v950 = vmul.f32 %v948, %v948
    %v951 = vsub.f32 %v949, %v950
    %v952 = vmax.f32 %v951, 0.0
    %v953 = vsub.f32 %v934, %v948
    %v954 = vadd.f32 %v952, 1e-10
    %v955 = vrsqrt.pop %v954
    %v956 = vmul.f32 %v953, %v955
    %s957 = scalar_lea.vmem [#allocation5], 1152
    %v958 = vld [vmem:[%s957] sm:$0xff]
    %v959 = vld [vmem:[%s957 + $0x8] sm:$0xff]
    %v960 = vld [vmem:[%s957 + $0x10] sm:$0xff]
    %v961 = vld [vmem:[%s957 + $0x18] sm:$0xff]
    %v962 = vld [vmem:[%s957 + $0x20] sm:$0xff]
    %v963 = vld [vmem:[%s957 + $0x28] sm:$0xff]
    %v964 = vld [vmem:[%s957 + $0x30] sm:$0xff]
    %v965 = vld [vmem:[%s957 + $0x38] sm:$0xff]
    %v966 = vld [vmem:[%s957 + $0x40] sm:$0xff]
    %v967 = vld [vmem:[%s957 + $0x48] sm:$0xff]
    %v968 = vld [vmem:[%s957 + $0x50] sm:$0xff]
    %v969 = vld [vmem:[%s957 + $0x58] sm:$0xff]
    %v970 = vld [vmem:[%s957 + $0x60] sm:$0xff]
    %v971 = vld [vmem:[%s957 + $0x68] sm:$0xff]
    %v972 = vld [vmem:[%s957 + $0x70] sm:$0xff]
    %v973 = vld [vmem:[%s957 + $0x78] sm:$0xff]
    %v974 = vld [vmem:[%s2 + $0x2] sm:$0x1]
    %v975 = vlaneseq
    %v976 = vshrl.u32 %v975, 7
    %v977 = vsub.s32 0, %v976
    %v978 = vrot.slane %v974, %v977
    %979 = vmatprep.subr.mxu0 0.0
    %980 = vmatpush1.msra.mxu0 %v958
    %981 = vmatprep.subr.mxu0 0.0
    %982 = vmatpush1.msra.mxu0 %v959
    %983 = vmatprep.subr.mxu0 0.0
    %984 = vmatpush1.msra.mxu0 %v960
    %985 = vmatprep.subr.mxu0 0.0
    %986 = vmatpush1.msra.mxu0 %v961
    %987 = vmatprep.subr.mxu0 0.0
    %988 = vmatpush1.msra.mxu0 %v962
    %989 = vmatprep.subr.mxu0 0.0
    %990 = vmatpush1.msra.mxu0 %v963
    %991 = vmatprep.subr.mxu0 0.0
    %992 = vmatpush1.msra.mxu0 %v964
    %993 = vmatprep.subr.mxu0 0.0
    %994 = vmatpush1.msra.mxu0 %v965
    %995 = vmatprep.subr.mxu0 0.0
    %996 = vmatpush1.msra.mxu0 %v966
    %997 = vmatprep.subr.mxu0 0.0
    %998 = vmatpush1.msra.mxu0 %v967
    %999 = vmatprep.subr.mxu0 0.0
    %1000 = vmatpush1.msra.mxu0 %v968
    %1001 = vmatprep.subr.mxu0 0.0
    %1002 = vmatpush1.msra.mxu0 %v969
    %1003 = vmatprep.subr.mxu0 0.0
    %1004 = vmatpush1.msra.mxu0 %v970
    %1005 = vmatprep.subr.mxu0 0.0
    %1006 = vmatpush1.msra.mxu0 %v971
    %1007 = vmatprep.subr.mxu0 0.0
    %1008 = vmatpush1.msra.mxu0 %v972
    %1009 = vmatprep.subr.mxu0 0.0
    %1010 = vmatpush1.msra.mxu0 %v973
    %1011 = vmatprep.subr.mxu0 0.0
    %1012 = vmatpush1.msra.mxu0 0.0
    %1013 = vmatprep.subr.mxu0 0.0
    %1014 = vmatpush1.msra.mxu0 0.0
    %1015 = vmatprep.subr.mxu0 0.0
    %1016 = vmatpush1.msra.mxu0 0.0
    %1017 = vmatprep.subr.mxu0 0.0
    %1018 = vmatpush1.msra.mxu0 0.0
    %1019 = vmatprep.subr.mxu0 0.0
    %1020 = vmatpush1.msra.mxu0 0.0
    %1021 = vmatprep.subr.mxu0 0.0
    %1022 = vmatpush1.msra.mxu0 0.0
    %1023 = vmatprep.subr.mxu0 0.0
    %1024 = vmatpush1.msra.mxu0 0.0
    %1025 = vmatprep.subr.mxu0 0.0
    %1026 = vmatpush1.msra.mxu0 0.0
    %1027 = vmatprep.subr.mxu0 0.0
    %1028 = vmatpush1.msra.mxu0 0.0
    %1029 = vmatprep.subr.mxu0 0.0
    %1030 = vmatpush1.msra.mxu0 0.0
    %1031 = vmatprep.subr.mxu0 0.0
    %1032 = vmatpush1.msra.mxu0 0.0
    %1033 = vmatprep.subr.mxu0 0.0
    %1034 = vmatpush1.msra.mxu0 0.0
    %1035 = vmatprep.subr.mxu0 0.0
    %1036 = vmatpush1.msra.mxu0 0.0
    %1037 = vmatprep.subr.mxu0 0.0
    %1038 = vmatpush1.msra.mxu0 0.0
    %1039 = vmatprep.subr.mxu0 0.0
    %1040 = vmatpush1.msra.mxu0 0.0
    %1041 = vmatprep.subr.mxu0 0.0
    %1042 = vmatpush1.msra.mxu0 0.0
    %1043 = vmatprep.mubr.f32.mxu0 0.0
    %1044 = vmatmul.mubr.f32.gmra.mrb[0].mxu0 %v842
    %v1045 = vpop.f32.mrb[0].mxu0
    %v1046 = vadd.f32 %v978, %v1045
    %v1047 = vpop.f32.mrb[0].mxu0
    %1048 = vdwg.mxu0
    %v1049 = vsub.f32 0.0, %v1046
    %v1050 = vmul.f32 %v1049, 1.442695
    %v1051 = vpow.pop %v1050
    %v1052 = vadd.f32 %v1051, 1.0
    %v1053 = vrcp.pop %v1052
    %v1054 = vmul.f32 %v1053, %v49
    %v1055 = vadd.f32 %v956, %v1054
    %s1056 = scalar_lea.vmem [#allocation5], 1280
    %v1057 = vld [vmem:[%s1056] sm:$0xff]
    %v1058 = vld [vmem:[%s1056 + $0x8] sm:$0xff]
    %v1059 = vld [vmem:[%s1056 + $0x10] sm:$0xff]
    %v1060 = vld [vmem:[%s1056 + $0x18] sm:$0xff]
    %v1061 = vld [vmem:[%s1056 + $0x20] sm:$0xff]
    %v1062 = vld [vmem:[%s1056 + $0x28] sm:$0xff]
    %v1063 = vld [vmem:[%s1056 + $0x30] sm:$0xff]
    %v1064 = vld [vmem:[%s1056 + $0x38] sm:$0xff]
    %v1065 = vld [vmem:[%s1056 + $0x40] sm:$0xff]
    %v1066 = vld [vmem:[%s1056 + $0x48] sm:$0xff]
    %v1067 = vld [vmem:[%s1056 + $0x50] sm:$0xff]
    %v1068 = vld [vmem:[%s1056 + $0x58] sm:$0xff]
    %v1069 = vld [vmem:[%s1056 + $0x60] sm:$0xff]
    %v1070 = vld [vmem:[%s1056 + $0x68] sm:$0xff]
    %v1071 = vld [vmem:[%s1056 + $0x70] sm:$0xff]
    %v1072 = vld [vmem:[%s1056 + $0x78] sm:$0xff]
    %1073 = vmatprep.subr.mxu0 0.0
    %1074 = vmatpush1.msra.mxu0 %v1057
    %1075 = vmatprep.subr.mxu0 0.0
    %1076 = vmatpush1.msra.mxu0 %v1058
    %1077 = vmatprep.subr.mxu0 0.0
    %1078 = vmatpush1.msra.mxu0 %v1059
    %1079 = vmatprep.subr.mxu0 0.0
    %1080 = vmatpush1.msra.mxu0 %v1060
    %1081 = vmatprep.subr.mxu0 0.0
    %1082 = vmatpush1.msra.mxu0 %v1061
    %1083 = vmatprep.subr.mxu0 0.0
    %1084 = vmatpush1.msra.mxu0 %v1062
    %1085 = vmatprep.subr.mxu0 0.0
    %1086 = vmatpush1.msra.mxu0 %v1063
    %1087 = vmatprep.subr.mxu0 0.0
    %1088 = vmatpush1.msra.mxu0 %v1064
    %1089 = vmatprep.subr.mxu0 0.0
    %1090 = vmatpush1.msra.mxu0 %v1065
    %1091 = vmatprep.subr.mxu0 0.0
    %1092 = vmatpush1.msra.mxu0 %v1066
    %1093 = vmatprep.subr.mxu0 0.0
    %1094 = vmatpush1.msra.mxu0 %v1067
    %1095 = vmatprep.subr.mxu0 0.0
    %1096 = vmatpush1.msra.mxu0 %v1068
    %1097 = vmatprep.subr.mxu0 0.0
    %1098 = vmatpush1.msra.mxu0 %v1069
    %1099 = vmatprep.subr.mxu0 0.0
    %1100 = vmatpush1.msra.mxu0 %v1070
    %1101 = vmatprep.subr.mxu0 0.0
    %1102 = vmatpush1.msra.mxu0 %v1071
    %1103 = vmatprep.subr.mxu0 0.0
    %1104 = vmatpush1.msra.mxu0 %v1072
    %1105 = vmatprep.subr.mxu0 0.0
    %1106 = vmatpush1.msra.mxu0 0.0
    %1107 = vmatprep.subr.mxu0 0.0
    %1108 = vmatpush1.msra.mxu0 0.0
    %1109 = vmatprep.subr.mxu0 0.0
    %1110 = vmatpush1.msra.mxu0 0.0
    %1111 = vmatprep.subr.mxu0 0.0
    %1112 = vmatpush1.msra.mxu0 0.0
    %1113 = vmatprep.subr.mxu0 0.0
    %1114 = vmatpush1.msra.mxu0 0.0
    %1115 = vmatprep.subr.mxu0 0.0
    %1116 = vmatpush1.msra.mxu0 0.0
    %1117 = vmatprep.subr.mxu0 0.0
    %1118 = vmatpush1.msra.mxu0 0.0
    %1119 = vmatprep.subr.mxu0 0.0
    %1120 = vmatpush1.msra.mxu0 0.0
    %1121 = vmatprep.subr.mxu0 0.0
    %1122 = vmatpush1.msra.mxu0 0.0
    %1123 = vmatprep.subr.mxu0 0.0
    %1124 = vmatpush1.msra.mxu0 0.0
    %1125 = vmatprep.subr.mxu0 0.0
    %1126 = vmatpush1.msra.mxu0 0.0
    %1127 = vmatprep.subr.mxu0 0.0
    %1128 = vmatpush1.msra.mxu0 0.0
    %1129 = vmatprep.subr.mxu0 0.0
    %1130 = vmatpush1.msra.mxu0 0.0
    %1131 = vmatprep.subr.mxu0 0.0
    %1132 = vmatpush1.msra.mxu0 0.0
    %1133 = vmatprep.subr.mxu0 0.0
    %1134 = vmatpush1.msra.mxu0 0.0
    %1135 = vmatprep.subr.mxu0 0.0
    %1136 = vmatpush1.msra.mxu0 0.0
    %1137 = vmatprep.mubr.f32.mxu0 0.0
    %1138 = vmatmul.mubr.f32.gmra.mrb[0].mxu0 %v1055
    %v1139 = vpop.f32.mrb[0].mxu0
    %v1140 = vadd.f32 0.0, %v1139
    %v1141 = vpop.f32.mrb[0].mxu0
    %1142 = vdwg.mxu0
    %v1143 = vlaneseq
    %v1144 = vshrl.u32 %v1143, 7
    %v1145 = vsub.s32 0, %v1144
    %v1146 = vrot.slane %v1140, %v1145
    %v1147 = vsub.f32 %v1140, %v1146
    %v1148 = vrot.slane %v1147, 4
    %v1149 = vadd.f32 %v1147, %v1148
    %v1150 = vrot.slane %v1149, 2
    %v1151 = vadd.f32 %v1149, %v1150
    %v1152 = vrot.slane %v1151, 1
    %v1153 = vadd.f32 %v1151, %v1152
    %v1154 = vmul.f32 %v1147, %v1147
    %v1155 = vrot.slane %v1154, 4
    %v1156 = vadd.f32 %v1154, %v1155
    %v1157 = vrot.slane %v1156, 2
    %v1158 = vadd.f32 %v1156, %v1157
    %v1159 = vrot.slane %v1158, 1
    %v1160 = vadd.f32 %v1158, %v1159
    %v1161 = vmul.f32 %v1153, 0.125
    %v1162 = vmul.f32 %v1160, 0.125
    %v1163 = vmul.f32 %v1161, %v1161
    %v1164 = vsub.f32 %v1162, %v1163
    %v1165 = vmax.f32 %v1164, 0.0
    %v1166 = vsub.f32 %v1147, %v1161
    %v1167 = vadd.f32 %v1165, 1e-10
    %v1168 = vrsqrt.pop %v1167
    %v1169 = vmul.f32 %v1166, %v1168
    %v1170 = vmax.f32 %v1169, 0.0
    %s1171 = scalar_lea.vmem [#allocation5], 1408
    %v1172 = vld [vmem:[%s1171] sm:$0xff]
    %v1173 = vld [vmem:[%s1171 + $0x8] sm:$0xff]
    %v1174 = vld [vmem:[%s1171 + $0x10] sm:$0xff]
    %v1175 = vld [vmem:[%s1171 + $0x18] sm:$0xff]
    %v1176 = vld [vmem:[%s1171 + $0x20] sm:$0xff]
    %v1177 = vld [vmem:[%s1171 + $0x28] sm:$0xff]
    %v1178 = vld [vmem:[%s1171 + $0x30] sm:$0xff]
    %v1179 = vld [vmem:[%s1171 + $0x38] sm:$0xff]
    %v1180 = vld [vmem:[%s1171 + $0x40] sm:$0xff]
    %v1181 = vld [vmem:[%s1171 + $0x48] sm:$0xff]
    %v1182 = vld [vmem:[%s1171 + $0x50] sm:$0xff]
    %v1183 = vld [vmem:[%s1171 + $0x58] sm:$0xff]
    %v1184 = vld [vmem:[%s1171 + $0x60] sm:$0xff]
    %v1185 = vld [vmem:[%s1171 + $0x68] sm:$0xff]
    %v1186 = vld [vmem:[%s1171 + $0x70] sm:$0xff]
    %v1187 = vld [vmem:[%s1171 + $0x78] sm:$0xff]
    %1188 = vmatprep.subr.mxu0 0.0
    %1189 = vmatpush1.msra.mxu0 %v1172
    %1190 = vmatprep.subr.mxu0 0.0
    %1191 = vmatpush1.msra.mxu0 %v1173
    %1192 = vmatprep.subr.mxu0 0.0
    %1193 = vmatpush1.msra.mxu0 %v1174
    %1194 = vmatprep.subr.mxu0 0.0
    %1195 = vmatpush1.msra.mxu0 %v1175
    %1196 = vmatprep.subr.mxu0 0.0
    %1197 = vmatpush1.msra.mxu0 %v1176
    %1198 = vmatprep.subr.mxu0 0.0
    %1199 = vmatpush1.msra.mxu0 %v1177
    %1200 = vmatprep.subr.mxu0 0.0
    %1201 = vmatpush1.msra.mxu0 %v1178
    %1202 = vmatprep.subr.mxu0 0.0
    %1203 = vmatpush1.msra.mxu0 %v1179
    %1204 = vmatprep.subr.mxu0 0.0
    %1205 = vmatpush1.msra.mxu0 %v1180
    %1206 = vmatprep.subr.mxu0 0.0
    %1207 = vmatpush1.msra.mxu0 %v1181
    %1208 = vmatprep.subr.mxu0 0.0
    %1209 = vmatpush1.msra.mxu0 %v1182
    %1210 = vmatprep.subr.mxu0 0.0
    %1211 = vmatpush1.msra.mxu0 %v1183
    %1212 = vmatprep.subr.mxu0 0.0
    %1213 = vmatpush1.msra.mxu0 %v1184
    %1214 = vmatprep.subr.mxu0 0.0
    %1215 = vmatpush1.msra.mxu0 %v1185
    %1216 = vmatprep.subr.mxu0 0.0
    %1217 = vmatpush1.msra.mxu0 %v1186
    %1218 = vmatprep.subr.mxu0 0.0
    %1219 = vmatpush1.msra.mxu0 %v1187
    %1220 = vmatprep.subr.mxu0 0.0
    %1221 = vmatpush1.msra.mxu0 0.0
    %1222 = vmatprep.subr.mxu0 0.0
    %1223 = vmatpush1.msra.mxu0 0.0
    %1224 = vmatprep.subr.mxu0 0.0
    %1225 = vmatpush1.msra.mxu0 0.0
    %1226 = vmatprep.subr.mxu0 0.0
    %1227 = vmatpush1.msra.mxu0 0.0
    %1228 = vmatprep.subr.mxu0 0.0
    %1229 = vmatpush1.msra.mxu0 0.0
    %1230 = vmatprep.subr.mxu0 0.0
    %1231 = vmatpush1.msra.mxu0 0.0
    %1232 = vmatprep.subr.mxu0 0.0
    %1233 = vmatpush1.msra.mxu0 0.0
    %1234 = vmatprep.subr.mxu0 0.0
    %1235 = vmatpush1.msra.mxu0 0.0
    %1236 = vmatprep.subr.mxu0 0.0
    %1237 = vmatpush1.msra.mxu0 0.0
    %1238 = vmatprep.subr.mxu0 0.0
    %1239 = vmatpush1.msra.mxu0 0.0
    %1240 = vmatprep.subr.mxu0 0.0
    %1241 = vmatpush1.msra.mxu0 0.0
    %1242 = vmatprep.subr.mxu0 0.0
    %1243 = vmatpush1.msra.mxu0 0.0
    %1244 = vmatprep.subr.mxu0 0.0
    %1245 = vmatpush1.msra.mxu0 0.0
    %1246 = vmatprep.subr.mxu0 0.0
    %1247 = vmatpush1.msra.mxu0 0.0
    %1248 = vmatprep.subr.mxu0 0.0
    %1249 = vmatpush1.msra.mxu0 0.0
    %1250 = vmatprep.subr.mxu0 0.0
    %1251 = vmatpush1.msra.mxu0 0.0
    %1252 = vmatprep.mubr.f32.mxu0 0.0
    %1253 = vmatmul.mubr.f32.gmra.mrb[0].mxu0 %v1170
    %v1254 = vpop.f32.mrb[0].mxu0
    %v1255 = vadd.f32 0.0, %v1254
    %v1256 = vpop.f32.mrb[0].mxu0
    %1257 = vdwg.mxu0
    %v1258 = vlaneseq
    %v1259 = vshrl.u32 %v1258, 7
    %v1260 = vsub.s32 0, %v1259
    %v1261 = vrot.slane %v1255, %v1260
    %v1262 = vsub.f32 %v1255, %v1261
    %v1263 = vrot.slane %v1262, 4
    %v1264 = vadd.f32 %v1262, %v1263
    %v1265 = vrot.slane %v1264, 2
    %v1266 = vadd.f32 %v1264, %v1265
    %v1267 = vrot.slane %v1266, 1
    %v1268 = vadd.f32 %v1266, %v1267
    %v1269 = vmul.f32 %v1262, %v1262
    %v1270 = vrot.slane %v1269, 4
    %v1271 = vadd.f32 %v1269, %v1270
    %v1272 = vrot.slane %v1271, 2
    %v1273 = vadd.f32 %v1271, %v1272
    %v1274 = vrot.slane %v1273, 1
    %v1275 = vadd.f32 %v1273, %v1274
    %v1276 = vmul.f32 %v1268, 0.125
    %v1277 = vmul.f32 %v1275, 0.125
    %v1278 = vmul.f32 %v1276, %v1276
    %v1279 = vsub.f32 %v1277, %v1278
    %v1280 = vmax.f32 %v1279, 0.0
    %v1281 = vsub.f32 %v1262, %v1276
    %v1282 = vadd.f32 %v1280, 1e-10
    %v1283 = vrsqrt.pop %v1282
    %v1284 = vmul.f32 %v1281, %v1283
    %v1285 = vmax.f32 %v1284, 0.0
    %s1286 = scalar_lea.vmem [#allocation5], 1536
    %v1287 = vld [vmem:[%s1286] sm:$0xff]
    %v1288 = vld [vmem:[%s1286 + $0x8] sm:$0xff]
    %v1289 = vld [vmem:[%s1286 + $0x10] sm:$0xff]
    %v1290 = vld [vmem:[%s1286 + $0x18] sm:$0xff]
    %v1291 = vld [vmem:[%s1286 + $0x20] sm:$0xff]
    %v1292 = vld [vmem:[%s1286 + $0x28] sm:$0xff]
    %v1293 = vld [vmem:[%s1286 + $0x30] sm:$0xff]
    %v1294 = vld [vmem:[%s1286 + $0x38] sm:$0xff]
    %v1295 = vld [vmem:[%s1286 + $0x40] sm:$0xff]
    %v1296 = vld [vmem:[%s1286 + $0x48] sm:$0xff]
    %v1297 = vld [vmem:[%s1286 + $0x50] sm:$0xff]
    %v1298 = vld [vmem:[%s1286 + $0x58] sm:$0xff]
    %v1299 = vld [vmem:[%s1286 + $0x60] sm:$0xff]
    %v1300 = vld [vmem:[%s1286 + $0x68] sm:$0xff]
    %v1301 = vld [vmem:[%s1286 + $0x70] sm:$0xff]
    %v1302 = vld [vmem:[%s1286 + $0x78] sm:$0xff]
    %1303 = vmatprep.subr.mxu0 0.0
    %1304 = vmatpush1.msra.mxu0 %v1287
    %1305 = vmatprep.subr.mxu0 0.0
    %1306 = vmatpush1.msra.mxu0 %v1288
    %1307 = vmatprep.subr.mxu0 0.0
    %1308 = vmatpush1.msra.mxu0 %v1289
    %1309 = vmatprep.subr.mxu0 0.0
    %1310 = vmatpush1.msra.mxu0 %v1290
    %1311 = vmatprep.subr.mxu0 0.0
    %1312 = vmatpush1.msra.mxu0 %v1291
    %1313 = vmatprep.subr.mxu0 0.0
    %1314 = vmatpush1.msra.mxu0 %v1292
    %1315 = vmatprep.subr.mxu0 0.0
    %1316 = vmatpush1.msra.mxu0 %v1293
    %1317 = vmatprep.subr.mxu0 0.0
    %1318 = vmatpush1.msra.mxu0 %v1294
    %1319 = vmatprep.subr.mxu0 0.0
    %1320 = vmatpush1.msra.mxu0 %v1295
    %1321 = vmatprep.subr.mxu0 0.0
    %1322 = vmatpush1.msra.mxu0 %v1296
    %1323 = vmatprep.subr.mxu0 0.0
    %1324 = vmatpush1.msra.mxu0 %v1297
    %1325 = vmatprep.subr.mxu0 0.0
    %1326 = vmatpush1.msra.mxu0 %v1298
    %1327 = vmatprep.subr.mxu0 0.0
    %1328 = vmatpush1.msra.mxu0 %v1299
    %1329 = vmatprep.subr.mxu0 0.0
    %1330 = vmatpush1.msra.mxu0 %v1300
    %1331 = vmatprep.subr.mxu0 0.0
    %1332 = vmatpush1.msra.mxu0 %v1301
    %1333 = vmatprep.subr.mxu0 0.0
    %1334 = vmatpush1.msra.mxu0 %v1302
    %1335 = vmatprep.subr.mxu0 0.0
    %1336 = vmatpush1.msra.mxu0 0.0
    %1337 = vmatprep.subr.mxu0 0.0
    %1338 = vmatpush1.msra.mxu0 0.0
    %1339 = vmatprep.subr.mxu0 0.0
    %1340 = vmatpush1.msra.mxu0 0.0
    %1341 = vmatprep.subr.mxu0 0.0
    %1342 = vmatpush1.msra.mxu0 0.0
    %1343 = vmatprep.subr.mxu0 0.0
    %1344 = vmatpush1.msra.mxu0 0.0
    %1345 = vmatprep.subr.mxu0 0.0
    %1346 = vmatpush1.msra.mxu0 0.0
    %1347 = vmatprep.subr.mxu0 0.0
    %1348 = vmatpush1.msra.mxu0 0.0
    %1349 = vmatprep.subr.mxu0 0.0
    %1350 = vmatpush1.msra.mxu0 0.0
    %1351 = vmatprep.subr.mxu0 0.0
    %1352 = vmatpush1.msra.mxu0 0.0
    %1353 = vmatprep.subr.mxu0 0.0
    %1354 = vmatpush1.msra.mxu0 0.0
    %1355 = vmatprep.subr.mxu0 0.0
    %1356 = vmatpush1.msra.mxu0 0.0
    %1357 = vmatprep.subr.mxu0 0.0
    %1358 = vmatpush1.msra.mxu0 0.0
    %1359 = vmatprep.subr.mxu0 0.0
    %1360 = vmatpush1.msra.mxu0 0.0
    %1361 = vmatprep.subr.mxu0 0.0
    %1362 = vmatpush1.msra.mxu0 0.0
    %1363 = vmatprep.subr.mxu0 0.0
    %1364 = vmatpush1.msra.mxu0 0.0
    %1365 = vmatprep.subr.mxu0 0.0
    %1366 = vmatpush1.msra.mxu0 0.0
    %1367 = vmatprep.mubr.f32.mxu0 0.0
    %1368 = vmatmul.mubr.f32.gmra.mrb[0].mxu0 %v1285
    %v1369 = vpop.f32.mrb[0].mxu0
    %v1370 = vadd.f32 0.0, %v1369
    %v1371 = vpop.f32.mrb[0].mxu0
    %1372 = vdwg.mxu0
    %v1373 = vlaneseq
    %v1374 = vshrl.u32 %v1373, 7
    %v1375 = vsub.s32 0, %v1374
    %v1376 = vrot.slane %v1370, %v1375
    %v1377 = vsub.f32 %v1370, %v1376
    %v1378 = vrot.slane %v1377, 4
    %v1379 = vadd.f32 %v1377, %v1378
    %v1380 = vrot.slane %v1379, 2
    %v1381 = vadd.f32 %v1379, %v1380
    %v1382 = vrot.slane %v1381, 1
    %v1383 = vadd.f32 %v1381, %v1382
    %v1384 = vmul.f32 %v1377, %v1377
    %v1385 = vrot.slane %v1384, 4
    %v1386 = vadd.f32 %v1384, %v1385
    %v1387 = vrot.slane %v1386, 2
    %v1388 = vadd.f32 %v1386, %v1387
    %v1389 = vrot.slane %v1388, 1
    %v1390 = vadd.f32 %v1388, %v1389
    %v1391 = vmul.f32 %v1383, 0.125
    %v1392 = vmul.f32 %v1390, 0.125
    %v1393 = vmul.f32 %v1391, %v1391
    %v1394 = vsub.f32 %v1392, %v1393
    %v1395 = vmax.f32 %v1394, 0.0
    %v1396 = vsub.f32 %v1377, %v1391
    %v1397 = vadd.f32 %v1395, 1e-10
    %v1398 = vrsqrt.pop %v1397
    %v1399 = vmul.f32 %v1396, %v1398
    %v1400 = vmax.f32 %v1399, 0.0
    %s1401 = scalar_lea.vmem [#allocation5], 1664
    %v1402 = vld [vmem:[%s1401] sm:$0xff]
    %v1403 = vld [vmem:[%s1401 + $0x8] sm:$0xff]
    %v1404 = vld [vmem:[%s1401 + $0x10] sm:$0xff]
    %v1405 = vld [vmem:[%s1401 + $0x18] sm:$0xff]
    %v1406 = vld [vmem:[%s1401 + $0x20] sm:$0xff]
    %v1407 = vld [vmem:[%s1401 + $0x28] sm:$0xff]
    %v1408 = vld [vmem:[%s1401 + $0x30] sm:$0xff]
    %v1409 = vld [vmem:[%s1401 + $0x38] sm:$0xff]
    %v1410 = vld [vmem:[%s1401 + $0x40] sm:$0xff]
    %v1411 = vld [vmem:[%s1401 + $0x48] sm:$0xff]
    %v1412 = vld [vmem:[%s1401 + $0x50] sm:$0xff]
    %v1413 = vld [vmem:[%s1401 + $0x58] sm:$0xff]
    %v1414 = vld [vmem:[%s1401 + $0x60] sm:$0xff]
    %v1415 = vld [vmem:[%s1401 + $0x68] sm:$0xff]
    %v1416 = vld [vmem:[%s1401 + $0x70] sm:$0xff]
    %v1417 = vld [vmem:[%s1401 + $0x78] sm:$0xff]
    %1418 = vmatprep.subr.mxu0 0.0
    %1419 = vmatpush1.msra.mxu0 %v1402
    %1420 = vmatprep.subr.mxu0 0.0
    %1421 = vmatpush1.msra.mxu0 %v1403
    %1422 = vmatprep.subr.mxu0 0.0
    %1423 = vmatpush1.msra.mxu0 %v1404
    %1424 = vmatprep.subr.mxu0 0.0
    %1425 = vmatpush1.msra.mxu0 %v1405
    %1426 = vmatprep.subr.mxu0 0.0
    %1427 = vmatpush1.msra.mxu0 %v1406
    %1428 = vmatprep.subr.mxu0 0.0
    %1429 = vmatpush1.msra.mxu0 %v1407
    %1430 = vmatprep.subr.mxu0 0.0
    %1431 = vmatpush1.msra.mxu0 %v1408
    %1432 = vmatprep.subr.mxu0 0.0
    %1433 = vmatpush1.msra.mxu0 %v1409
    %1434 = vmatprep.subr.mxu0 0.0
    %1435 = vmatpush1.msra.mxu0 %v1410
    %1436 = vmatprep.subr.mxu0 0.0
    %1437 = vmatpush1.msra.mxu0 %v1411
    %1438 = vmatprep.subr.mxu0 0.0
    %1439 = vmatpush1.msra.mxu0 %v1412
    %1440 = vmatprep.subr.mxu0 0.0
    %1441 = vmatpush1.msra.mxu0 %v1413
    %1442 = vmatprep.subr.mxu0 0.0
    %1443 = vmatpush1.msra.mxu0 %v1414
    %1444 = vmatprep.subr.mxu0 0.0
    %1445 = vmatpush1.msra.mxu0 %v1415
    %1446 = vmatprep.subr.mxu0 0.0
    %1447 = vmatpush1.msra.mxu0 %v1416
    %1448 = vmatprep.subr.mxu0 0.0
    %1449 = vmatpush1.msra.mxu0 %v1417
    %1450 = vmatprep.subr.mxu0 0.0
    %1451 = vmatpush1.msra.mxu0 0.0
    %1452 = vmatprep.subr.mxu0 0.0
    %1453 = vmatpush1.msra.mxu0 0.0
    %1454 = vmatprep.subr.mxu0 0.0
    %1455 = vmatpush1.msra.mxu0 0.0
    %1456 = vmatprep.subr.mxu0 0.0
    %1457 = vmatpush1.msra.mxu0 0.0
    %1458 = vmatprep.subr.mxu0 0.0
    %1459 = vmatpush1.msra.mxu0 0.0
    %1460 = vmatprep.subr.mxu0 0.0
    %1461 = vmatpush1.msra.mxu0 0.0
    %1462 = vmatprep.subr.mxu0 0.0
    %1463 = vmatpush1.msra.mxu0 0.0
    %1464 = vmatprep.subr.mxu0 0.0
    %1465 = vmatpush1.msra.mxu0 0.0
    %1466 = vmatprep.subr.mxu0 0.0
    %1467 = vmatpush1.msra.mxu0 0.0
    %1468 = vmatprep.subr.mxu0 0.0
    %1469 = vmatpush1.msra.mxu0 0.0
    %1470 = vmatprep.subr.mxu0 0.0
    %1471 = vmatpush1.msra.mxu0 0.0
    %1472 = vmatprep.subr.mxu0 0.0
    %1473 = vmatpush1.msra.mxu0 0.0
    %1474 = vmatprep.subr.mxu0 0.0
    %1475 = vmatpush1.msra.mxu0 0.0
    %1476 = vmatprep.subr.mxu0 0.0
    %1477 = vmatpush1.msra.mxu0 0.0
    %1478 = vmatprep.subr.mxu0 0.0
    %1479 = vmatpush1.msra.mxu0 0.0
    %1480 = vmatprep.subr.mxu0 0.0
    %1481 = vmatpush1.msra.mxu0 0.0
    %1482 = vmatprep.mubr.f32.mxu0 0.0
    %1483 = vmatmul.mubr.f32.gmra.mrb[0].mxu0 %v1400
    %v1484 = vpop.f32.mrb[0].mxu0
    %v1485 = vadd.f32 0.0, %v1484
    %v1486 = vpop.f32.mrb[0].mxu0
    %1487 = vdwg.mxu0
    %v1488 = vlaneseq
    %v1489 = vshrl.u32 %v1488, 7
    %v1490 = vsub.s32 0, %v1489
    %v1491 = vrot.slane %v1485, %v1490
    %v1492 = vsub.f32 %v1485, %v1491
    %v1493 = vrot.slane %v1492, 4
    %v1494 = vadd.f32 %v1492, %v1493
    %v1495 = vrot.slane %v1494, 2
    %v1496 = vadd.f32 %v1494, %v1495
    %v1497 = vrot.slane %v1496, 1
    %v1498 = vadd.f32 %v1496, %v1497
    %v1499 = vmul.f32 %v1492, %v1492
    %v1500 = vrot.slane %v1499, 4
    %v1501 = vadd.f32 %v1499, %v1500
    %v1502 = vrot.slane %v1501, 2
    %v1503 = vadd.f32 %v1501, %v1502
    %v1504 = vrot.slane %v1503, 1
    %v1505 = vadd.f32 %v1503, %v1504
    %v1506 = vmul.f32 %v1498, 0.125
    %v1507 = vmul.f32 %v1505, 0.125
    %v1508 = vmul.f32 %v1506, %v1506
    %v1509 = vsub.f32 %v1507, %v1508
    %v1510 = vmax.f32 %v1509, 0.0
    %v1511 = vsub.f32 %v1492, %v1506
    %v1512 = vadd.f32 %v1510, 1e-10
    %v1513 = vrsqrt.pop %v1512
    %v1514 = vmul.f32 %v1511, %v1513
    %v1515 = vmax.f32 %v1514, 0.0
    %s1516 = scalar_lea.vmem [#allocation5], 1792
    %v1517 = vld [vmem:[%s1516] sm:$0xff]
    %v1518 = vld [vmem:[%s1516 + $0x8] sm:$0xff]
    %v1519 = vld [vmem:[%s1516 + $0x10] sm:$0xff]
    %v1520 = vld [vmem:[%s1516 + $0x18] sm:$0xff]
    %v1521 = vld [vmem:[%s1516 + $0x20] sm:$0xff]
    %v1522 = vld [vmem:[%s1516 + $0x28] sm:$0xff]
    %v1523 = vld [vmem:[%s1516 + $0x30] sm:$0xff]
    %v1524 = vld [vmem:[%s1516 + $0x38] sm:$0xff]
    %v1525 = vld [vmem:[%s1516 + $0x40] sm:$0xff]
    %v1526 = vld [vmem:[%s1516 + $0x48] sm:$0xff]
    %v1527 = vld [vmem:[%s1516 + $0x50] sm:$0xff]
    %v1528 = vld [vmem:[%s1516 + $0x58] sm:$0xff]
    %v1529 = vld [vmem:[%s1516 + $0x60] sm:$0xff]
    %v1530 = vld [vmem:[%s1516 + $0x68] sm:$0xff]
    %v1531 = vld [vmem:[%s1516 + $0x70] sm:$0xff]
    %v1532 = vld [vmem:[%s1516 + $0x78] sm:$0xff]
    %1533 = vmatprep.subr.mxu0 0.0
    %1534 = vmatpush1.msra.mxu0 %v1517
    %1535 = vmatprep.subr.mxu0 0.0
    %1536 = vmatpush1.msra.mxu0 %v1518
    %1537 = vmatprep.subr.mxu0 0.0
    %1538 = vmatpush1.msra.mxu0 %v1519
    %1539 = vmatprep.subr.mxu0 0.0
    %1540 = vmatpush1.msra.mxu0 %v1520
    %1541 = vmatprep.subr.mxu0 0.0
    %1542 = vmatpush1.msra.mxu0 %v1521
    %1543 = vmatprep.subr.mxu0 0.0
    %1544 = vmatpush1.msra.mxu0 %v1522
    %1545 = vmatprep.subr.mxu0 0.0
    %1546 = vmatpush1.msra.mxu0 %v1523
    %1547 = vmatprep.subr.mxu0 0.0
    %1548 = vmatpush1.msra.mxu0 %v1524
    %1549 = vmatprep.subr.mxu0 0.0
    %1550 = vmatpush1.msra.mxu0 %v1525
    %1551 = vmatprep.subr.mxu0 0.0
    %1552 = vmatpush1.msra.mxu0 %v1526
    %1553 = vmatprep.subr.mxu0 0.0
    %1554 = vmatpush1.msra.mxu0 %v1527
    %1555 = vmatprep.subr.mxu0 0.0
    %1556 = vmatpush1.msra.mxu0 %v1528
    %1557 = vmatprep.subr.mxu0 0.0
    %1558 = vmatpush1.msra.mxu0 %v1529
    %1559 = vmatprep.subr.mxu0 0.0
    %1560 = vmatpush1.msra.mxu0 %v1530
    %1561 = vmatprep.subr.mxu0 0.0
    %1562 = vmatpush1.msra.mxu0 %v1531
    %1563 = vmatprep.subr.mxu0 0.0
    %1564 = vmatpush1.msra.mxu0 %v1532
    %1565 = vmatprep.subr.mxu0 0.0
    %1566 = vmatpush1.msra.mxu0 0.0
    %1567 = vmatprep.subr.mxu0 0.0
    %1568 = vmatpush1.msra.mxu0 0.0
    %1569 = vmatprep.subr.mxu0 0.0
    %1570 = vmatpush1.msra.mxu0 0.0
    %1571 = vmatprep.subr.mxu0 0.0
    %1572 = vmatpush1.msra.mxu0 0.0
    %1573 = vmatprep.subr.mxu0 0.0
    %1574 = vmatpush1.msra.mxu0 0.0
    %1575 = vmatprep.subr.mxu0 0.0
    %1576 = vmatpush1.msra.mxu0 0.0
    %1577 = vmatprep.subr.mxu0 0.0
    %1578 = vmatpush1.msra.mxu0 0.0
    %1579 = vmatprep.subr.mxu0 0.0
    %1580 = vmatpush1.msra.mxu0 0.0
    %1581 = vmatprep.subr.mxu0 0.0
    %1582 = vmatpush1.msra.mxu0 0.0
    %1583 = vmatprep.subr.mxu0 0.0
    %1584 = vmatpush1.msra.mxu0 0.0
    %1585 = vmatprep.subr.mxu0 0.0
    %1586 = vmatpush1.msra.mxu0 0.0
    %1587 = vmatprep.subr.mxu0 0.0
    %1588 = vmatpush1.msra.mxu0 0.0
    %1589 = vmatprep.subr.mxu0 0.0
    %1590 = vmatpush1.msra.mxu0 0.0
    %1591 = vmatprep.subr.mxu0 0.0
    %1592 = vmatpush1.msra.mxu0 0.0
    %1593 = vmatprep.subr.mxu0 0.0
    %1594 = vmatpush1.msra.mxu0 0.0
    %1595 = vmatprep.subr.mxu0 0.0
    %1596 = vmatpush1.msra.mxu0 0.0
    %1597 = vmatprep.mubr.f32.mxu0 0.0
    %1598 = vmatmul.mubr.f32.gmra.mrb[0].mxu0 %v1515
    %v1599 = vpop.f32.mrb[0].mxu0
    %v1600 = vadd.f32 0.0, %v1599
    %v1601 = vpop.f32.mrb[0].mxu0
    %1602 = vdwg.mxu0
    %v1603 = vlaneseq
    %v1604 = vshrl.u32 %v1603, 7
    %v1605 = vsub.s32 0, %v1604
    %v1606 = vrot.slane %v1600, %v1605
    %v1607 = vsub.f32 %v1600, %v1606
    %v1608 = vrot.slane %v1607, 4
    %v1609 = vadd.f32 %v1607, %v1608
    %v1610 = vrot.slane %v1609, 2
    %v1611 = vadd.f32 %v1609, %v1610
    %v1612 = vrot.slane %v1611, 1
    %v1613 = vadd.f32 %v1611, %v1612
    %v1614 = vmul.f32 %v1607, %v1607
    %v1615 = vrot.slane %v1614, 4
    %v1616 = vadd.f32 %v1614, %v1615
    %v1617 = vrot.slane %v1616, 2
    %v1618 = vadd.f32 %v1616, %v1617
    %v1619 = vrot.slane %v1618, 1
    %v1620 = vadd.f32 %v1618, %v1619
    %v1621 = vmul.f32 %v1613, 0.125
    %v1622 = vmul.f32 %v1620, 0.125
    %v1623 = vmul.f32 %v1621, %v1621
    %v1624 = vsub.f32 %v1622, %v1623
    %v1625 = vmax.f32 %v1624, 0.0
    %v1626 = vsub.f32 %v1607, %v1621
    %v1627 = vadd.f32 %v1625, 1e-10
    %v1628 = vrsqrt.pop %v1627
    %v1629 = vmul.f32 %v1626, %v1628
    %v1630 = vmax.f32 %v1629, 0.0
    %s1631 = scalar_lea.vmem [#allocation5], 1920
    %v1632 = vld [vmem:[%s1631] sm:$0xff]
    %v1633 = vld [vmem:[%s1631 + $0x8] sm:$0xff]
    %v1634 = vld [vmem:[%s1631 + $0x10] sm:$0xff]
    %v1635 = vld [vmem:[%s1631 + $0x18] sm:$0xff]
    %v1636 = vld [vmem:[%s1631 + $0x20] sm:$0xff]
    %v1637 = vld [vmem:[%s1631 + $0x28] sm:$0xff]
    %v1638 = vld [vmem:[%s1631 + $0x30] sm:$0xff]
    %v1639 = vld [vmem:[%s1631 + $0x38] sm:$0xff]
    %v1640 = vld [vmem:[%s1631 + $0x40] sm:$0xff]
    %v1641 = vld [vmem:[%s1631 + $0x48] sm:$0xff]
    %v1642 = vld [vmem:[%s1631 + $0x50] sm:$0xff]
    %v1643 = vld [vmem:[%s1631 + $0x58] sm:$0xff]
    %v1644 = vld [vmem:[%s1631 + $0x60] sm:$0xff]
    %v1645 = vld [vmem:[%s1631 + $0x68] sm:$0xff]
    %v1646 = vld [vmem:[%s1631 + $0x70] sm:$0xff]
    %v1647 = vld [vmem:[%s1631 + $0x78] sm:$0xff]
    %v1648 = vld [vmem:[%s2 + $0x3] sm:$0x1]
    %v1649 = vlaneseq
    %v1650 = vshrl.u32 %v1649, 7
    %v1651 = vsub.s32 0, %v1650
    %v1652 = vrot.slane %v1648, %v1651
    %1653 = vmatprep.subr.mxu0 0.0
    %1654 = vmatpush1.msra.mxu0 %v1632
    %1655 = vmatprep.subr.mxu0 0.0
    %1656 = vmatpush1.msra.mxu0 %v1633
    %1657 = vmatprep.subr.mxu0 0.0
    %1658 = vmatpush1.msra.mxu0 %v1634
    %1659 = vmatprep.subr.mxu0 0.0
    %1660 = vmatpush1.msra.mxu0 %v1635
    %1661 = vmatprep.subr.mxu0 0.0
    %1662 = vmatpush1.msra.mxu0 %v1636
    %1663 = vmatprep.subr.mxu0 0.0
    %1664 = vmatpush1.msra.mxu0 %v1637
    %1665 = vmatprep.subr.mxu0 0.0
    %1666 = vmatpush1.msra.mxu0 %v1638
    %1667 = vmatprep.subr.mxu0 0.0
    %1668 = vmatpush1.msra.mxu0 %v1639
    %1669 = vmatprep.subr.mxu0 0.0
    %1670 = vmatpush1.msra.mxu0 %v1640
    %1671 = vmatprep.subr.mxu0 0.0
    %1672 = vmatpush1.msra.mxu0 %v1641
    %1673 = vmatprep.subr.mxu0 0.0
    %1674 = vmatpush1.msra.mxu0 %v1642
    %1675 = vmatprep.subr.mxu0 0.0
    %1676 = vmatpush1.msra.mxu0 %v1643
    %1677 = vmatprep.subr.mxu0 0.0
    %1678 = vmatpush1.msra.mxu0 %v1644
    %1679 = vmatprep.subr.mxu0 0.0
    %1680 = vmatpush1.msra.mxu0 %v1645
    %1681 = vmatprep.subr.mxu0 0.0
    %1682 = vmatpush1.msra.mxu0 %v1646
    %1683 = vmatprep.subr.mxu0 0.0
    %1684 = vmatpush1.msra.mxu0 %v1647
    %1685 = vmatprep.subr.mxu0 0.0
    %1686 = vmatpush1.msra.mxu0 0.0
    %1687 = vmatprep.subr.mxu0 0.0
    %1688 = vmatpush1.msra.mxu0 0.0
    %1689 = vmatprep.subr.mxu0 0.0
    %1690 = vmatpush1.msra.mxu0 0.0
    %1691 = vmatprep.subr.mxu0 0.0
    %1692 = vmatpush1.msra.mxu0 0.0
    %1693 = vmatprep.subr.mxu0 0.0
    %1694 = vmatpush1.msra.mxu0 0.0
    %1695 = vmatprep.subr.mxu0 0.0
    %1696 = vmatpush1.msra.mxu0 0.0
    %1697 = vmatprep.subr.mxu0 0.0
    %1698 = vmatpush1.msra.mxu0 0.0
    %1699 = vmatprep.subr.mxu0 0.0
    %1700 = vmatpush1.msra.mxu0 0.0
    %1701 = vmatprep.subr.mxu0 0.0
    %1702 = vmatpush1.msra.mxu0 0.0
    %1703 = vmatprep.subr.mxu0 0.0
    %1704 = vmatpush1.msra.mxu0 0.0
    %1705 = vmatprep.subr.mxu0 0.0
    %1706 = vmatpush1.msra.mxu0 0.0
    %1707 = vmatprep.subr.mxu0 0.0
    %1708 = vmatpush1.msra.mxu0 0.0
    %1709 = vmatprep.subr.mxu0 0.0
    %1710 = vmatpush1.msra.mxu0 0.0
    %1711 = vmatprep.subr.mxu0 0.0
    %1712 = vmatpush1.msra.mxu0 0.0
    %1713 = vmatprep.subr.mxu0 0.0
    %1714 = vmatpush1.msra.mxu0 0.0
    %1715 = vmatprep.subr.mxu0 0.0
    %1716 = vmatpush1.msra.mxu0 0.0
    %1717 = vmatprep.mubr.f32.mxu0 0.0
    %1718 = vmatmul.mubr.f32.gmra.mrb[0].mxu0 %v1630
    %v1719 = vpop.f32.mrb[0].mxu0
    %v1720 = vadd.f32 %v1652, %v1719
    %v1721 = vpop.f32.mrb[0].mxu0
    %1722 = vdwg.mxu0
    %v1723 = vmax.f32 %v1720, 0.0
    %v1724 = vadd.f32 %v1055, %v1723
    %1725 = vst [vmem:[#allocation7] sm:$0xff] %v1724
    // Predicated region
    $region22: #{tpu_custom_call.1} parent=1 // pred_check
      _
    $region23: #{tpu_custom_call.1} parent=1 // pred_check_branch
      %1727 = sbr.rel (0) target = $region25
    $region24: #{tpu_custom_call.1} parent=1 // pred_region
      %s1729 = ssub.s32 128, 128
      %1730 = vsyncadd [#allocation4], %s1729
      %s1732 = sshll.u32 [#allocation7], 4
      %s1733 = int_to_ptr.vmem [resolvable:$true] %s1732
      %1735 = dma.vmem_to_hbm [thread:$0]  %s1733, 128, %s3, [#allocation4]
    $region25: #{tpu_custom_call.1} parent=1 // pred_fallthru
      _
    // Predicated region
    $region26: #{tpu_custom_call.1} parent=1 // pred_check
      _
    $region27: #{tpu_custom_call.1} parent=1 // pred_check_branch
      %1737 = sbr.rel (0) target = $region29
    $region28: #{tpu_custom_call.1} parent=1 // pred_region
      %1738 = dma.done [#allocation4], 128
    $region29: #{tpu_custom_call.1} parent=1 // pred_fallthru
      _
    %1739 = vsyncpa [#allocation3], 1
    %1740 = vsyncpa [#allocation6], 1
    %1741 = vsyncpa [#allocation4], 1

</llo_original>
